<compile_context>
chip_gen: v5e
topology: v5e:2x2
jax: 0.10.0
libtpu: 0.0.40
codegen_flags: <defaults>
</compile_context>

<pallas_src>
import functools

import jax
import jax.numpy as jnp
from jax.experimental import pallas as pl
from jax.experimental.pallas import tpu as pltpu

INPUT_DIM = 13      # numeric features in the ICU dataset (13 vitals/labs)
HIDDEN_DIM = 64
N_LAYERS = 2
OUTPUT_DIM = 1
SEQ_LEN = 8


def lstm_kernel(x_ref, wih0_ref, b0_ref, wf_ref, fcw_ref, fcb_ref,
                out_ref, gx_ref, *, seq_len):
    """Whole forward pass in one kernel invocation (grid = ()).

    All fused operands were prepared in the wrapper:
      x_ref    : (T_pad, 16)   zero-padded inputs (row T..T_pad-1 are zero)
      wih0_ref : (16, 512)     input projection weights, layer-1 columns zero
      b0_ref   : (1, 512)      folded biases for both layers
      wf_ref   : (128, 512)    fused recurrent weight [whh0 (padded) ; wih1/whh1]
      fcw_ref  : (1, 128)      fc weight on layer-1 lanes, zeros on layer-0 lanes
      fcb_ref  : (1, 1)
    Column layout of the 512-wide gate axis: [i0|i1|f0|f1|g0|g1|o0|o1]
    (each block 64 lanes); g-gate columns are pre-scaled by 2 so one wide
    sigmoid + (2*s - 1) recovers tanh exactly.
    """
    H = HIDDEN_DIM
    H2 = 2 * H           # 128 combined lanes: [layer0 | layer1]

    # Input projection + biases for every timestep in ONE matmul (no serial
    # dependency -> off the critical path).  Stored to VMEM scratch so the
    # (T_pad, 512) result is not held live in vregs across the recurrence.
    gx_ref[...] = (jnp.dot(x_ref[...], wih0_ref[...],
                           preferred_element_type=jnp.float32)
                   + b0_ref[...])

    # Lane mask selecting the layer-0 half (lanes 0:H) of the combined state.
    lane = jax.lax.broadcasted_iota(jnp.int32, (1, H2), 1)
    mask_l0 = lane < H

    # Combined states carried in vregs: lanes 0:H = layer 0 at step t,
    # lanes H:2H = layer 1 at step t-1 (one-layer skew).
    h = jnp.zeros((1, H2), jnp.float32)
    c = jnp.zeros((1, H2), jnp.float32)

    # Fully unrolled static loop (T is tiny) so the scheduler sees across
    # iterations; seq_len + 1 iterations because of the skew.
    for t in range(seq_len + 1):
        g = gx_ref[t:t + 1, :]                                  # (1, 512)
        if t > 0:
            # Single fused MXU issue per iteration: layer-0 gates of step t
            # and layer-1 gates of step t-1 from the same (1,128) LHS.
            # Weight read through the ref (not hoisted) -> no 64-vreg live
            # range / spills on the critical chain.
            g = g + jnp.dot(h, wf_ref[...],
                            preferred_element_type=jnp.float32)

        # One wide sigmoid over all 8 gate blocks (both layers at once).
        s = jax.nn.sigmoid(g)
        i_g = s[:, 0 * H2:1 * H2]
        f_g = s[:, 1 * H2:2 * H2]
        g_g = 2.0 * s[:, 2 * H2:3 * H2] - 1.0     # tanh via pre-scaled cols
        o_g = s[:, 3 * H2:4 * H2]

        c_new = f_g * c + i_g * g_g
        h_new = o_g * jnp.tanh(c_new)

        if t == 0:
            # Layer-1 "step -1" does not exist: keep its lanes at zero so the
            # bias-only gates of the first skew iteration don't propagate.
            c = jnp.where(mask_l0, c_new, 0.0)
            h = jnp.where(mask_l0, h_new, 0.0)
        else:
            # (At t == seq_len the layer-0 lanes hold a bogus "step T" state;
            #  it is never read afterwards, so no mask is needed there.)
            c, h = c_new, h_new

    # fc(out[:, -1, :]) + sigmoid.  fcw has zeros on the layer-0 lanes, so the
    # unused half of `h` contributes nothing.  VPU multiply + lane reduction
    # keeps the epilogue off the MXU.
    logit = (jnp.sum(h * fcw_ref[...], axis=-1, keepdims=True)
             + fcb_ref[...])                                    # (1, 1)
    out_ref[...] = jax.nn.sigmoid(logit)


def init_params(key):
    """Deterministic parameter init matching PyTorch's nn.LSTM / nn.Linear
    shapes (uniform(-1/sqrt(fan), 1/sqrt(fan)))."""
    H, D = HIDDEN_DIM, INPUT_DIM
    k_lstm = 1.0 / jnp.sqrt(jnp.float32(H))
    k_fc = 1.0 / jnp.sqrt(jnp.float32(H))
    keys = jax.random.split(key, 10)

    def u(k, shape, bound):
        return jax.random.uniform(k, shape, jnp.float32, -bound, bound)

    return {
        # layer 0
        'wih0': u(keys[0], (4 * H, D), k_lstm),
        'whh0': u(keys[1], (4 * H, H), k_lstm),
        'bih0': u(keys[2], (4 * H,), k_lstm),
        'bhh0': u(keys[3], (4 * H,), k_lstm),
        # layer 1
        'wih1': u(keys[4], (4 * H, H), k_lstm),
        'whh1': u(keys[5], (4 * H, H), k_lstm),
        'bih1': u(keys[6], (4 * H,), k_lstm),
        'bhh1': u(keys[7], (4 * H,), k_lstm),
        # fc head
        'fcw': u(keys[8], (OUTPUT_DIM, H), k_fc),
        'fcb': u(keys[9], (OUTPUT_DIM,), k_fc),
    }


@jax.jit
def lstm_forward(x, params):
    """x: (T, INPUT_DIM) float32  ->  (1, OUTPUT_DIM) sigmoid probability."""
    H = HIDDEN_DIM
    D = INPUT_DIM
    T = x.shape[0]
    D_pad = 16                                # lane-friendly input width
    T_pad = ((T + 1 + 7) // 8) * 8            # +1 skew row, sublane-aligned

    def gate_slice(k):
        return slice(k * H, (k + 1) * H)

    # Build fused operands with the per-gate interleaved column layout
    # [ i0 | i1 | f0 | f1 | g0 | g1 | o0 | o1 ]  (each block H lanes wide).
    wf_cols, wih0_cols, b_cols = [], [], []
    zeros_hh = jnp.zeros((H, H), jnp.float32)
    zeros_dg = jnp.zeros((D_pad, H), jnp.float32)
    b0 = params['bih0'] + params['bhh0']
    b1 = params['bih1'] + params['bhh1']
    for k in range(4):                         # PyTorch gate order i, f, g, o
        sl = gate_slice(k)
        scale = 2.0 if k == 2 else 1.0         # pre-scale g-gate (tanh trick)
        # Fused recurrent weight rows = [h0 lanes ; h1 lanes] (K padded to 128):
        l0_blk = jnp.concatenate([params['whh0'][sl].T, zeros_hh], axis=0)
        l1_blk = jnp.concatenate([params['wih1'][sl].T,
                                  params['whh1'][sl].T], axis=0)
        wf_cols += [l0_blk * scale, l1_blk * scale]
        # Input projection weight (layer 0 only), rows padded D -> D_pad:
        w_in = jnp.zeros((D_pad, H), jnp.float32).at[:D].set(
            params['wih0'][sl].T) * scale
        wih0_cols += [w_in, zeros_dg]
        # Folded biases for both layers:
        b_cols += [b0[sl] * scale, b1[sl] * scale]

    wf = jnp.concatenate(wf_cols, axis=1)             # (128, 512)
    wih0_full = jnp.concatenate(wih0_cols, axis=1)    # (16, 512)
    b_full = jnp.concatenate(b_cols)[None, :]         # (1, 512)

    # Zero-padded input: extra rows cover the skewed final iteration and
    # sublane alignment; zero rows are harmless (only b is picked up there
    # and those outputs are masked / unused).
    x_pad = jnp.zeros((T_pad, D_pad), jnp.float32).at[:T, :D].set(x)

    # fc weight on the layer-1 lanes of the combined (1,128) state.
    fcw_full = jnp.concatenate(
        [jnp.zeros((OUTPUT_DIM, H), jnp.float32), params['fcw']], axis=1)
    fcb = params['fcb'][None, :]                      # (1, 1)

    vmem = pl.BlockSpec(memory_space=pltpu.MemorySpace.VMEM)
    return pl.pallas_call(
        functools.partial(lstm_kernel, seq_len=T),
        out_shape=jax.ShapeDtypeStruct((1, OUTPUT_DIM), jnp.float32),
        in_specs=[vmem] * 6,
        out_specs=vmem,
        scratch_shapes=[pltpu.VMEM((T_pad, 8 * H), jnp.float32)],
    )(x_pad, wih0_full, b_full, wf, fcw_full, fcb)


def lstm_ref(x, p):
    """Pure-JAX reference mirroring torch.nn.LSTM(batch_first) semantics."""
    H = HIDDEN_DIM

    def cell(x_t, h, c, wih, whh, bih, bhh):
        g = x_t @ wih.T + bih + h @ whh.T + bhh
        i = jax.nn.sigmoid(g[:H])
        f = jax.nn.sigmoid(g[H:2 * H])
        gg = jnp.tanh(g[2 * H:3 * H])
        o = jax.nn.sigmoid(g[3 * H:])
        c = f * c + i * gg
        return o * jnp.tanh(c), c

    h0 = jnp.zeros(H); c0 = jnp.zeros(H)
    h1 = jnp.zeros(H); c1 = jnp.zeros(H)
    for t in range(x.shape[0]):
        h0, c0 = cell(x[t], h0, c0, p['wih0'], p['whh0'], p['bih0'], p['bhh0'])
        h1, c1 = cell(h0, h1, c1, p['wih1'], p['whh1'], p['bih1'], p['bhh1'])
    logits = h1 @ p['fcw'].T + p['fcb']
    return jax.nn.sigmoid(logits)[None, :]


if __name__ == "__main__":
    key = jax.random.PRNGKey(0)
    k_param, k_x = jax.random.split(key)
    params = init_params(k_param)

    # Single patient time-series: (seq_len, input_dim) — the forward
    # unsqueezes this to batch=1 internally.
    x = jax.random.normal(k_x, (SEQ_LEN, INPUT_DIM), dtype=jnp.float32)

    out = lstm_forward(x, params)
    out = jax.block_until_ready(out)

    ref = lstm_ref(x, params)
    assert out.shape == (1, OUTPUT_DIM), out.shape
    assert jnp.allclose(out, ref, atol=1e-4, rtol=1e-4), (out, ref)

    print("KERNEL_OK")
</pallas_src>

<mosaic_0001>
module attributes {stable_mosaic.version = 11 : i64} {
  func.func @lstm_kernel(%arg0: memref<16x16xf32, #tpu.memory_space<vmem>>, %arg1: memref<16x512xf32, #tpu.memory_space<vmem>>, %arg2: memref<1x512xf32, #tpu.memory_space<vmem>>, %arg3: memref<128x512xf32, #tpu.memory_space<vmem>>, %arg4: memref<1x128xf32, #tpu.memory_space<vmem>>, %arg5: memref<1x1xf32, #tpu.memory_space<vmem>>, %arg6: memref<1x1xf32, #tpu.memory_space<vmem>>, %arg7: memref<16x512xf32, #tpu.memory_space<vmem>>) attributes {dimension_semantics = [], scalar_prefetch = 0 : i64, scratch_operands = 1 : i64, tpu.core_type = #tpu.core_type<tc>} {
    %c0 = arith.constant 0 : index
    %c0_0 = arith.constant 0 : index
    %0 = vector.load %arg0[%c0, %c0_0] : memref<16x16xf32, #tpu.memory_space<vmem>>, vector<16x16xf32>
    %c0_1 = arith.constant 0 : index
    %c0_2 = arith.constant 0 : index
    %1 = vector.load %arg1[%c0_1, %c0_2] : memref<16x512xf32, #tpu.memory_space<vmem>>, vector<16x512xf32>
    %cst = arith.constant dense<0.000000e+00> : vector<16x512xf32>
    %2 = tpu.matmul %0, %1, %cst {dimension_numbers = #tpu.dot_dimension_numbers<[1], [0], [0], [1], [0, 0, 1, 1], [], []>} : vector<16x16xf32>, vector<16x512xf32>, vector<16x512xf32> -> vector<16x512xf32>
    %c0_3 = arith.constant 0 : index
    %c0_4 = arith.constant 0 : index
    %3 = vector.load %arg2[%c0_3, %c0_4] : memref<1x512xf32, #tpu.memory_space<vmem>>, vector<1x512xf32>
    %4 = vector.broadcast %3 : vector<1x512xf32> to vector<16x512xf32>
    %5 = arith.addf %2, %4 : vector<16x512xf32>
    %c0_5 = arith.constant 0 : index
    %c0_6 = arith.constant 0 : index
    %6 = vector.load %arg7[%c0_5, %c0_6] : memref<16x512xf32, #tpu.memory_space<vmem>>, vector<16x512xf32>
    tpu.vector_store %arg7[%c0_5, %c0_6], %5 {strides = array<i32>} : memref<16x512xf32, #tpu.memory_space<vmem>>, vector<16x512xf32>,
    %7 = tpu.iota {dimensions = array<i32: 1>} : vector<1x128xi32>
    %c64_i32 = arith.constant 64 : i32
    %8 = vector.broadcast %c64_i32 : i32 to vector<1x128xi32>
    %9 = arith.cmpi slt, %7, %8 : vector<1x128xi32>
    %cst_7 = arith.constant 0.000000e+00 : f32
    %10 = vector.broadcast %cst_7 : f32 to vector<1x128xf32>
    %c0_8 = arith.constant 0 : index
    %c0_9 = arith.constant 0 : index
    %11 = vector.load %arg7[%c0_8, %c0_9] : memref<16x512xf32, #tpu.memory_space<vmem>>, vector<1x512xf32>
    %12 = arith.negf %11 : vector<1x512xf32>
    %13 = math.exp %12 : vector<1x512xf32>
    %cst_10 = arith.constant 1.000000e+00 : f32
    %14 = vector.broadcast %cst_10 : f32 to vector<1x512xf32>
    %15 = arith.addf %14, %13 : vector<1x512xf32>
    %16 = arith.divf %14, %15 : vector<1x512xf32>
    %17 = vector.extract_strided_slice %16 {offsets = [0, 0], sizes = [1, 128], strides = [1, 1]} : vector<1x512xf32> to vector<1x128xf32>
    %18 = vector.extract_strided_slice %16 {offsets = [0, 128], sizes = [1, 128], strides = [1, 1]} : vector<1x512xf32> to vector<1x128xf32>
    %19 = vector.extract_strided_slice %16 {offsets = [0, 256], sizes = [1, 128], strides = [1, 1]} : vector<1x512xf32> to vector<1x128xf32>
    %cst_11 = arith.constant 2.000000e+00 : f32
    %20 = vector.broadcast %cst_11 : f32 to vector<1x128xf32>
    %21 = arith.mulf %20, %19 : vector<1x128xf32>
    %cst_12 = arith.constant 1.000000e+00 : f32
    %22 = vector.broadcast %cst_12 : f32 to vector<1x128xf32>
    %23 = arith.subf %21, %22 : vector<1x128xf32>
    %24 = vector.extract_strided_slice %16 {offsets = [0, 384], sizes = [1, 128], strides = [1, 1]} : vector<1x512xf32> to vector<1x128xf32>
    %25 = arith.mulf %18, %10 : vector<1x128xf32>
    %26 = arith.mulf %17, %23 : vector<1x128xf32>
    %27 = arith.addf %25, %26 : vector<1x128xf32>
    %28 = math.tanh %27 : vector<1x128xf32>
    %29 = arith.mulf %24, %28 : vector<1x128xf32>
    %cst_13 = arith.constant 0.000000e+00 : f32
    %30 = vector.broadcast %cst_13 : f32 to vector<1x128xf32>
    %31 = arith.select %9, %27, %30 : vector<1x128xi1>, vector<1x128xf32>
    %cst_14 = arith.constant 0.000000e+00 : f32
    %32 = vector.broadcast %cst_14 : f32 to vector<1x128xf32>
    %33 = arith.select %9, %29, %32 : vector<1x128xi1>, vector<1x128xf32>
    %c1 = arith.constant 1 : index
    %c0_15 = arith.constant 0 : index
    %34 = vector.load %arg7[%c1, %c0_15] : memref<16x512xf32, #tpu.memory_space<vmem>>, vector<1x512xf32>
    %c0_16 = arith.constant 0 : index
    %c0_17 = arith.constant 0 : index
    %35 = vector.load %arg3[%c0_16, %c0_17] : memref<128x512xf32, #tpu.memory_space<vmem>>, vector<128x512xf32>
    %cst_18 = arith.constant dense<0.000000e+00> : vector<1x512xf32>
    %36 = tpu.matmul %33, %35, %cst_18 {dimension_numbers = #tpu.dot_dimension_numbers<[1], [0], [0], [1], [0, 0, 1, 1], [], []>} : vector<1x128xf32>, vector<128x512xf32>, vector<1x512xf32> -> vector<1x512xf32>
    %37 = arith.addf %34, %36 : vector<1x512xf32>
    %38 = arith.negf %37 : vector<1x512xf32>
    %39 = math.exp %38 : vector<1x512xf32>
    %cst_19 = arith.constant 1.000000e+00 : f32
    %40 = vector.broadcast %cst_19 : f32 to vector<1x512xf32>
    %41 = arith.addf %40, %39 : vector<1x512xf32>
    %42 = arith.divf %40, %41 : vector<1x512xf32>
    %43 = vector.extract_strided_slice %42 {offsets = [0, 0], sizes = [1, 128], strides = [1, 1]} : vector<1x512xf32> to vector<1x128xf32>
    %44 = vector.extract_strided_slice %42 {offsets = [0, 128], sizes = [1, 128], strides = [1, 1]} : vector<1x512xf32> to vector<1x128xf32>
    %45 = vector.extract_strided_slice %42 {offsets = [0, 256], sizes = [1, 128], strides = [1, 1]} : vector<1x512xf32> to vector<1x128xf32>
    %cst_20 = arith.constant 2.000000e+00 : f32
    %46 = vector.broadcast %cst_20 : f32 to vector<1x128xf32>
    %47 = arith.mulf %46, %45 : vector<1x128xf32>
    %cst_21 = arith.constant 1.000000e+00 : f32
    %48 = vector.broadcast %cst_21 : f32 to vector<1x128xf32>
    %49 = arith.subf %47, %48 : vector<1x128xf32>
    %50 = vector.extract_strided_slice %42 {offsets = [0, 384], sizes = [1, 128], strides = [1, 1]} : vector<1x512xf32> to vector<1x128xf32>
    %51 = arith.mulf %44, %31 : vector<1x128xf32>
    %52 = arith.mulf %43, %49 : vector<1x128xf32>
    %53 = arith.addf %51, %52 : vector<1x128xf32>
    %54 = math.tanh %53 : vector<1x128xf32>
    %55 = arith.mulf %50, %54 : vector<1x128xf32>
    %c2 = arith.constant 2 : index
    %c0_22 = arith.constant 0 : index
    %56 = vector.load %arg7[%c2, %c0_22] : memref<16x512xf32, #tpu.memory_space<vmem>>, vector<1x512xf32>
    %c0_23 = arith.constant 0 : index
    %c0_24 = arith.constant 0 : index
    %57 = vector.load %arg3[%c0_23, %c0_24] : memref<128x512xf32, #tpu.memory_space<vmem>>, vector<128x512xf32>
    %cst_25 = arith.constant dense<0.000000e+00> : vector<1x512xf32>
    %58 = tpu.matmul %55, %57, %cst_25 {dimension_numbers = #tpu.dot_dimension_numbers<[1], [0], [0], [1], [0, 0, 1, 1], [], []>} : vector<1x128xf32>, vector<128x512xf32>, vector<1x512xf32> -> vector<1x512xf32>
    %59 = arith.addf %56, %58 : vector<1x512xf32>
    %60 = arith.negf %59 : vector<1x512xf32>
    %61 = math.exp %60 : vector<1x512xf32>
    %cst_26 = arith.constant 1.000000e+00 : f32
    %62 = vector.broadcast %cst_26 : f32 to vector<1x512xf32>
    %63 = arith.addf %62, %61 : vector<1x512xf32>
    %64 = arith.divf %62, %63 : vector<1x512xf32>
    %65 = vector.extract_strided_slice %64 {offsets = [0, 0], sizes = [1, 128], strides = [1, 1]} : vector<1x512xf32> to vector<1x128xf32>
    %66 = vector.extract_strided_slice %64 {offsets = [0, 128], sizes = [1, 128], strides = [1, 1]} : vector<1x512xf32> to vector<1x128xf32>
    %67 = vector.extract_strided_slice %64 {offsets = [0, 256], sizes = [1, 128], strides = [1, 1]} : vector<1x512xf32> to vector<1x128xf32>
    %cst_27 = arith.constant 2.000000e+00 : f32
    %68 = vector.broadcast %cst_27 : f32 to vector<1x128xf32>
    %69 = arith.mulf %68, %67 : vector<1x128xf32>
    %cst_28 = arith.constant 1.000000e+00 : f32
    %70 = vector.broadcast %cst_28 : f32 to vector<1x128xf32>
    %71 = arith.subf %69, %70 : vector<1x128xf32>
    %72 = vector.extract_strided_slice %64 {offsets = [0, 384], sizes = [1, 128], strides = [1, 1]} : vector<1x512xf32> to vector<1x128xf32>
    %73 = arith.mulf %66, %53 : vector<1x128xf32>
    %74 = arith.mulf %65, %71 : vector<1x128xf32>
    %75 = arith.addf %73, %74 : vector<1x128xf32>
    %76 = math.tanh %75 : vector<1x128xf32>
    %77 = arith.mulf %72, %76 : vector<1x128xf32>
    %c3 = arith.constant 3 : index
    %c0_29 = arith.constant 0 : index
    %78 = vector.load %arg7[%c3, %c0_29] : memref<16x512xf32, #tpu.memory_space<vmem>>, vector<1x512xf32>
    %c0_30 = arith.constant 0 : index
    %c0_31 = arith.constant 0 : index
    %79 = vector.load %arg3[%c0_30, %c0_31] : memref<128x512xf32, #tpu.memory_space<vmem>>, vector<128x512xf32>
    %cst_32 = arith.constant dense<0.000000e+00> : vector<1x512xf32>
    %80 = tpu.matmul %77, %79, %cst_32 {dimension_numbers = #tpu.dot_dimension_numbers<[1], [0], [0], [1], [0, 0, 1, 1], [], []>} : vector<1x128xf32>, vector<128x512xf32>, vector<1x512xf32> -> vector<1x512xf32>
    %81 = arith.addf %78, %80 : vector<1x512xf32>
    %82 = arith.negf %81 : vector<1x512xf32>
    %83 = math.exp %82 : vector<1x512xf32>
    %cst_33 = arith.constant 1.000000e+00 : f32
    %84 = vector.broadcast %cst_33 : f32 to vector<1x512xf32>
    %85 = arith.addf %84, %83 : vector<1x512xf32>
    %86 = arith.divf %84, %85 : vector<1x512xf32>
    %87 = vector.extract_strided_slice %86 {offsets = [0, 0], sizes = [1, 128], strides = [1, 1]} : vector<1x512xf32> to vector<1x128xf32>
    %88 = vector.extract_strided_slice %86 {offsets = [0, 128], sizes = [1, 128], strides = [1, 1]} : vector<1x512xf32> to vector<1x128xf32>
    %89 = vector.extract_strided_slice %86 {offsets = [0, 256], sizes = [1, 128], strides = [1, 1]} : vector<1x512xf32> to vector<1x128xf32>
    %cst_34 = arith.constant 2.000000e+00 : f32
    %90 = vector.broadcast %cst_34 : f32 to vector<1x128xf32>
    %91 = arith.mulf %90, %89 : vector<1x128xf32>
    %cst_35 = arith.constant 1.000000e+00 : f32
    %92 = vector.broadcast %cst_35 : f32 to vector<1x128xf32>
    %93 = arith.subf %91, %92 : vector<1x128xf32>
    %94 = vector.extract_strided_slice %86 {offsets = [0, 384], sizes = [1, 128], strides = [1, 1]} : vector<1x512xf32> to vector<1x128xf32>
    %95 = arith.mulf %88, %75 : vector<1x128xf32>
    %96 = arith.mulf %87, %93 : vector<1x128xf32>
    %97 = arith.addf %95, %96 : vector<1x128xf32>
    %98 = math.tanh %97 : vector<1x128xf32>
    %99 = arith.mulf %94, %98 : vector<1x128xf32>
    %c4 = arith.constant 4 : index
    %c0_36 = arith.constant 0 : index
    %100 = vector.load %arg7[%c4, %c0_36] : memref<16x512xf32, #tpu.memory_space<vmem>>, vector<1x512xf32>
    %c0_37 = arith.constant 0 : index
    %c0_38 = arith.constant 0 : index
    %101 = vector.load %arg3[%c0_37, %c0_38] : memref<128x512xf32, #tpu.memory_space<vmem>>, vector<128x512xf32>
    %cst_39 = arith.constant dense<0.000000e+00> : vector<1x512xf32>
    %102 = tpu.matmul %99, %101, %cst_39 {dimension_numbers = #tpu.dot_dimension_numbers<[1], [0], [0], [1], [0, 0, 1, 1], [], []>} : vector<1x128xf32>, vector<128x512xf32>, vector<1x512xf32> -> vector<1x512xf32>
    %103 = arith.addf %100, %102 : vector<1x512xf32>
    %104 = arith.negf %103 : vector<1x512xf32>
    %105 = math.exp %104 : vector<1x512xf32>
    %cst_40 = arith.constant 1.000000e+00 : f32
    %106 = vector.broadcast %cst_40 : f32 to vector<1x512xf32>
    %107 = arith.addf %106, %105 : vector<1x512xf32>
    %108 = arith.divf %106, %107 : vector<1x512xf32>
    %109 = vector.extract_strided_slice %108 {offsets = [0, 0], sizes = [1, 128], strides = [1, 1]} : vector<1x512xf32> to vector<1x128xf32>
    %110 = vector.extract_strided_slice %108 {offsets = [0, 128], sizes = [1, 128], strides = [1, 1]} : vector<1x512xf32> to vector<1x128xf32>
    %111 = vector.extract_strided_slice %108 {offsets = [0, 256], sizes = [1, 128], strides = [1, 1]} : vector<1x512xf32> to vector<1x128xf32>
    %cst_41 = arith.constant 2.000000e+00 : f32
    %112 = vector.broadcast %cst_41 : f32 to vector<1x128xf32>
    %113 = arith.mulf %112, %111 : vector<1x128xf32>
    %cst_42 = arith.constant 1.000000e+00 : f32
    %114 = vector.broadcast %cst_42 : f32 to vector<1x128xf32>
    %115 = arith.subf %113, %114 : vector<1x128xf32>
    %116 = vector.extract_strided_slice %108 {offsets = [0, 384], sizes = [1, 128], strides = [1, 1]} : vector<1x512xf32> to vector<1x128xf32>
    %117 = arith.mulf %110, %97 : vector<1x128xf32>
    %118 = arith.mulf %109, %115 : vector<1x128xf32>
    %119 = arith.addf %117, %118 : vector<1x128xf32>
    %120 = math.tanh %119 : vector<1x128xf32>
    %121 = arith.mulf %116, %120 : vector<1x128xf32>
    %c5 = arith.constant 5 : index
    %c0_43 = arith.constant 0 : index
    %122 = vector.load %arg7[%c5, %c0_43] : memref<16x512xf32, #tpu.memory_space<vmem>>, vector<1x512xf32>
    %c0_44 = arith.constant 0 : index
    %c0_45 = arith.constant 0 : index
    %123 = vector.load %arg3[%c0_44, %c0_45] : memref<128x512xf32, #tpu.memory_space<vmem>>, vector<128x512xf32>
    %cst_46 = arith.constant dense<0.000000e+00> : vector<1x512xf32>
    %124 = tpu.matmul %121, %123, %cst_46 {dimension_numbers = #tpu.dot_dimension_numbers<[1], [0], [0], [1], [0, 0, 1, 1], [], []>} : vector<1x128xf32>, vector<128x512xf32>, vector<1x512xf32> -> vector<1x512xf32>
    %125 = arith.addf %122, %124 : vector<1x512xf32>
    %126 = arith.negf %125 : vector<1x512xf32>
    %127 = math.exp %126 : vector<1x512xf32>
    %cst_47 = arith.constant 1.000000e+00 : f32
    %128 = vector.broadcast %cst_47 : f32 to vector<1x512xf32>
    %129 = arith.addf %128, %127 : vector<1x512xf32>
    %130 = arith.divf %128, %129 : vector<1x512xf32>
    %131 = vector.extract_strided_slice %130 {offsets = [0, 0], sizes = [1, 128], strides = [1, 1]} : vector<1x512xf32> to vector<1x128xf32>
    %132 = vector.extract_strided_slice %130 {offsets = [0, 128], sizes = [1, 128], strides = [1, 1]} : vector<1x512xf32> to vector<1x128xf32>
    %133 = vector.extract_strided_slice %130 {offsets = [0, 256], sizes = [1, 128], strides = [1, 1]} : vector<1x512xf32> to vector<1x128xf32>
    %cst_48 = arith.constant 2.000000e+00 : f32
    %134 = vector.broadcast %cst_48 : f32 to vector<1x128xf32>
    %135 = arith.mulf %134, %133 : vector<1x128xf32>
    %cst_49 = arith.constant 1.000000e+00 : f32
    %136 = vector.broadcast %cst_49 : f32 to vector<1x128xf32>
    %137 = arith.subf %135, %136 : vector<1x128xf32>
    %138 = vector.extract_strided_slice %130 {offsets = [0, 384], sizes = [1, 128], strides = [1, 1]} : vector<1x512xf32> to vector<1x128xf32>
    %139 = arith.mulf %132, %119 : vector<1x128xf32>
    %140 = arith.mulf %131, %137 : vector<1x128xf32>
    %141 = arith.addf %139, %140 : vector<1x128xf32>
    %142 = math.tanh %141 : vector<1x128xf32>
    %143 = arith.mulf %138, %142 : vector<1x128xf32>
    %c6 = arith.constant 6 : index
    %c0_50 = arith.constant 0 : index
    %144 = vector.load %arg7[%c6, %c0_50] : memref<16x512xf32, #tpu.memory_space<vmem>>, vector<1x512xf32>
    %c0_51 = arith.constant 0 : index
    %c0_52 = arith.constant 0 : index
    %145 = vector.load %arg3[%c0_51, %c0_52] : memref<128x512xf32, #tpu.memory_space<vmem>>, vector<128x512xf32>
    %cst_53 = arith.constant dense<0.000000e+00> : vector<1x512xf32>
    %146 = tpu.matmul %143, %145, %cst_53 {dimension_numbers = #tpu.dot_dimension_numbers<[1], [0], [0], [1], [0, 0, 1, 1], [], []>} : vector<1x128xf32>, vector<128x512xf32>, vector<1x512xf32> -> vector<1x512xf32>
    %147 = arith.addf %144, %146 : vector<1x512xf32>
    %148 = arith.negf %147 : vector<1x512xf32>
    %149 = math.exp %148 : vector<1x512xf32>
    %cst_54 = arith.constant 1.000000e+00 : f32
    %150 = vector.broadcast %cst_54 : f32 to vector<1x512xf32>
    %151 = arith.addf %150, %149 : vector<1x512xf32>
    %152 = arith.divf %150, %151 : vector<1x512xf32>
    %153 = vector.extract_strided_slice %152 {offsets = [0, 0], sizes = [1, 128], strides = [1, 1]} : vector<1x512xf32> to vector<1x128xf32>
    %154 = vector.extract_strided_slice %152 {offsets = [0, 128], sizes = [1, 128], strides = [1, 1]} : vector<1x512xf32> to vector<1x128xf32>
    %155 = vector.extract_strided_slice %152 {offsets = [0, 256], sizes = [1, 128], strides = [1, 1]} : vector<1x512xf32> to vector<1x128xf32>
    %cst_55 = arith.constant 2.000000e+00 : f32
    %156 = vector.broadcast %cst_55 : f32 to vector<1x128xf32>
    %157 = arith.mulf %156, %155 : vector<1x128xf32>
    %cst_56 = arith.constant 1.000000e+00 : f32
    %158 = vector.broadcast %cst_56 : f32 to vector<1x128xf32>
    %159 = arith.subf %157, %158 : vector<1x128xf32>
    %160 = vector.extract_strided_slice %152 {offsets = [0, 384], sizes = [1, 128], strides = [1, 1]} : vector<1x512xf32> to vector<1x128xf32>
    %161 = arith.mulf %154, %141 : vector<1x128xf32>
    %162 = arith.mulf %153, %159 : vector<1x128xf32>
    %163 = arith.addf %161, %162 : vector<1x128xf32>
    %164 = math.tanh %163 : vector<1x128xf32>
    %165 = arith.mulf %160, %164 : vector<1x128xf32>
    %c7 = arith.constant 7 : index
    %c0_57 = arith.constant 0 : index
    %166 = vector.load %arg7[%c7, %c0_57] : memref<16x512xf32, #tpu.memory_space<vmem>>, vector<1x512xf32>
    %c0_58 = arith.constant 0 : index
    %c0_59 = arith.constant 0 : index
    %167 = vector.load %arg3[%c0_58, %c0_59] : memref<128x512xf32, #tpu.memory_space<vmem>>, vector<128x512xf32>
    %cst_60 = arith.constant dense<0.000000e+00> : vector<1x512xf32>
    %168 = tpu.matmul %165, %167, %cst_60 {dimension_numbers = #tpu.dot_dimension_numbers<[1], [0], [0], [1], [0, 0, 1, 1], [], []>} : vector<1x128xf32>, vector<128x512xf32>, vector<1x512xf32> -> vector<1x512xf32>
    %169 = arith.addf %166, %168 : vector<1x512xf32>
    %170 = arith.negf %169 : vector<1x512xf32>
    %171 = math.exp %170 : vector<1x512xf32>
    %cst_61 = arith.constant 1.000000e+00 : f32
    %172 = vector.broadcast %cst_61 : f32 to vector<1x512xf32>
    %173 = arith.addf %172, %171 : vector<1x512xf32>
    %174 = arith.divf %172, %173 : vector<1x512xf32>
    %175 = vector.extract_strided_slice %174 {offsets = [0, 0], sizes = [1, 128], strides = [1, 1]} : vector<1x512xf32> to vector<1x128xf32>
    %176 = vector.extract_strided_slice %174 {offsets = [0, 128], sizes = [1, 128], strides = [1, 1]} : vector<1x512xf32> to vector<1x128xf32>
    %177 = vector.extract_strided_slice %174 {offsets = [0, 256], sizes = [1, 128], strides = [1, 1]} : vector<1x512xf32> to vector<1x128xf32>
    %cst_62 = arith.constant 2.000000e+00 : f32
    %178 = vector.broadcast %cst_62 : f32 to vector<1x128xf32>
    %179 = arith.mulf %178, %177 : vector<1x128xf32>
    %cst_63 = arith.constant 1.000000e+00 : f32
    %180 = vector.broadcast %cst_63 : f32 to vector<1x128xf32>
    %181 = arith.subf %179, %180 : vector<1x128xf32>
    %182 = vector.extract_strided_slice %174 {offsets = [0, 384], sizes = [1, 128], strides = [1, 1]} : vector<1x512xf32> to vector<1x128xf32>
    %183 = arith.mulf %176, %163 : vector<1x128xf32>
    %184 = arith.mulf %175, %181 : vector<1x128xf32>
    %185 = arith.addf %183, %184 : vector<1x128xf32>
    %186 = math.tanh %185 : vector<1x128xf32>
    %187 = arith.mulf %182, %186 : vector<1x128xf32>
    %c8 = arith.constant 8 : index
    %c0_64 = arith.constant 0 : index
    %188 = vector.load %arg7[%c8, %c0_64] : memref<16x512xf32, #tpu.memory_space<vmem>>, vector<1x512xf32>
    %c0_65 = arith.constant 0 : index
    %c0_66 = arith.constant 0 : index
    %189 = vector.load %arg3[%c0_65, %c0_66] : memref<128x512xf32, #tpu.memory_space<vmem>>, vector<128x512xf32>
    %cst_67 = arith.constant dense<0.000000e+00> : vector<1x512xf32>
    %190 = tpu.matmul %187, %189, %cst_67 {dimension_numbers = #tpu.dot_dimension_numbers<[1], [0], [0], [1], [0, 0, 1, 1], [], []>} : vector<1x128xf32>, vector<128x512xf32>, vector<1x512xf32> -> vector<1x512xf32>
    %191 = arith.addf %188, %190 : vector<1x512xf32>
    %192 = arith.negf %191 : vector<1x512xf32>
    %193 = math.exp %192 : vector<1x512xf32>
    %cst_68 = arith.constant 1.000000e+00 : f32
    %194 = vector.broadcast %cst_68 : f32 to vector<1x512xf32>
    %195 = arith.addf %194, %193 : vector<1x512xf32>
    %196 = arith.divf %194, %195 : vector<1x512xf32>
    %197 = vector.extract_strided_slice %196 {offsets = [0, 0], sizes = [1, 128], strides = [1, 1]} : vector<1x512xf32> to vector<1x128xf32>
    %198 = vector.extract_strided_slice %196 {offsets = [0, 128], sizes = [1, 128], strides = [1, 1]} : vector<1x512xf32> to vector<1x128xf32>
    %199 = vector.extract_strided_slice %196 {offsets = [0, 256], sizes = [1, 128], strides = [1, 1]} : vector<1x512xf32> to vector<1x128xf32>
    %cst_69 = arith.constant 2.000000e+00 : f32
    %200 = vector.broadcast %cst_69 : f32 to vector<1x128xf32>
    %201 = arith.mulf %200, %199 : vector<1x128xf32>
    %cst_70 = arith.constant 1.000000e+00 : f32
    %202 = vector.broadcast %cst_70 : f32 to vector<1x128xf32>
    %203 = arith.subf %201, %202 : vector<1x128xf32>
    %204 = vector.extract_strided_slice %196 {offsets = [0, 384], sizes = [1, 128], strides = [1, 1]} : vector<1x512xf32> to vector<1x128xf32>
    %205 = arith.mulf %198, %185 : vector<1x128xf32>
    %206 = arith.mulf %197, %203 : vector<1x128xf32>
    %207 = arith.addf %205, %206 : vector<1x128xf32>
    %208 = math.tanh %207 : vector<1x128xf32>
    %209 = arith.mulf %204, %208 : vector<1x128xf32>
    %c0_71 = arith.constant 0 : index
    %c0_72 = arith.constant 0 : index
    %210 = vector.load %arg4[%c0_71, %c0_72] : memref<1x128xf32, #tpu.memory_space<vmem>>, vector<1x128xf32>
    %211 = arith.mulf %209, %210 : vector<1x128xf32>
    %cst_73 = arith.constant dense<0.000000e+00> : vector<1xf32>
    %212 = vector.multi_reduction <add>, %211, %cst_73 [1] : vector<1x128xf32> to vector<1xf32>
    %213 = vector.shape_cast %212 : vector<1xf32> to vector<1x1xf32>
    %c0_74 = arith.constant 0 : index
    %c0_75 = arith.constant 0 : index
    %214 = vector.load %arg5[%c0_74, %c0_75] : memref<1x1xf32, #tpu.memory_space<vmem>>, vector<1x1xf32>
    %215 = arith.addf %213, %214 : vector<1x1xf32>
    %216 = arith.negf %215 : vector<1x1xf32>
    %217 = math.exp %216 : vector<1x1xf32>
    %cst_76 = arith.constant 1.000000e+00 : f32
    %218 = vector.broadcast %cst_76 : f32 to vector<1x1xf32>
    %219 = arith.addf %218, %217 : vector<1x1xf32>
    %220 = arith.divf %218, %219 : vector<1x1xf32>
    %c0_77 = arith.constant 0 : index
    %c0_78 = arith.constant 0 : index
    %221 = vector.load %arg6[%c0_77, %c0_78] : memref<1x1xf32, #tpu.memory_space<vmem>>, vector<1x1xf32>
    tpu.vector_store %arg6[%c0_77, %c0_78], %220 {strides = array<i32>} : memref<1x1xf32, #tpu.memory_space<vmem>>, vector<1x1xf32>,
    return
  }
}

</mosaic_0001>

<llo_original>
// kernel: lstm_forward.1
$region0: #{lstm_forward.1}
  #allocation0 [shape = 'u32[]', space=smem, size = 0x4, offset = 0x4, fixed_abs, tag = 'smem constant byte address 0x4 - core index']
  #allocation1 [shape = 'u32[72,128]{1,0:T(1,128)}', space=vmem, size = 0x9000, scoped, tag = 'internal scratch']
  #allocation2 [shape = 'f32[16,512]{1,0:T(8,128)}', space=vmem, size = 0x8000, scoped, tag = 'scratch operand']
  #allocation3 [shape = 'f32[1,1]{1,0:T(1,128)S(1)}', space=vmem, size = 0x200, scoped, tag = 'scoped memory for lstm_forward.1']
  %s0 = inlined_call_operand.vmem [shape: f32[16,16], index: 0, kind: input, shape index: {}]
  %s1 = inlined_call_operand.vmem [shape: f32[16,512], index: 1, kind: input, shape index: {}]
  %s2 = inlined_call_operand.vmem [shape: f32[1,512], index: 2, kind: input, shape index: {}]
  %s3 = inlined_call_operand.vmem [shape: f32[128,512], index: 3, kind: input, shape index: {}]
  %s4 = inlined_call_operand.vmem [shape: f32[1,128], index: 4, kind: input, shape index: {}]
  %s5 = inlined_call_operand.<no memory space> [shape: f32[1,1], index: 5, kind: input, shape index: {}]
  %s6 = inlined_call_operand.hbm [shape: f32[1,1], index: 6, kind: output, shape index: {}]
  %s7 = sld [smem:[#allocation0]]
  $region34: #{lstm_forward.1} parent=0
    _
  %s9 = ssub.s32 1, %s7
  %s10 = scalar_select 0, %s9, %s7
  %v11 = vstv %s5
  %12 = vst [vmem:[#allocation3] sm:$0x1] %v11
  $region1: #{lstm_forward.1} parent=0
    #allocation4 [shape = 'u8[512]{0}', space=vmem, size = 0x400, scoped, tag = 'output window, operand 0, single buffered']
    #allocation5 [shape = 's32[1]{0}', space=sflag, size = 0x4, scoped, tag = 'scoped memory for lstm_forward.1']
    %13 = vsyncpa [#allocation5], 0
    // Predicated region
    $region2: #{lstm_forward.1} parent=1 // pred_check
      _
    $region3: #{lstm_forward.1} parent=1 // pred_check_branch
      %15 = sbr.rel (0) target = $region5
    $region4: #{lstm_forward.1} parent=1 // pred_region
      _
    $region5: #{lstm_forward.1} parent=1 // pred_fallthru
      _
    // Predicated region
    $region6: #{lstm_forward.1} parent=1 // pred_check
      _
    $region7: #{lstm_forward.1} parent=1 // pred_check_branch
      %17 = sbr.rel (0) target = $region9
    $region8: #{lstm_forward.1} parent=1 // pred_region
      _
    $region9: #{lstm_forward.1} parent=1 // pred_fallthru
      _
    // Predicated region
    $region10: #{lstm_forward.1} parent=1 // pred_check
      _
    $region11: #{lstm_forward.1} parent=1 // pred_check_branch
      %19 = sbr.rel (0) target = $region13
    $region12: #{lstm_forward.1} parent=1 // pred_region
      _
    $region13: #{lstm_forward.1} parent=1 // pred_fallthru
      _
    // Predicated region
    $region14: #{lstm_forward.1} parent=1 // pred_check
      _
    $region15: #{lstm_forward.1} parent=1 // pred_check_branch
      %21 = sbr.rel (0) target = $region17
    $region16: #{lstm_forward.1} parent=1 // pred_region
      _
    $region17: #{lstm_forward.1} parent=1 // pred_fallthru
      _
    // Predicated region
    $region18: #{lstm_forward.1} parent=1 // pred_check
      _
    $region19: #{lstm_forward.1} parent=1 // pred_check_branch
      %23 = sbr.rel (0) target = $region21
    $region20: #{lstm_forward.1} parent=1 // pred_region
      _
    $region21: #{lstm_forward.1} parent=1 // pred_fallthru
      _
    // Predicated region
    $region22: #{lstm_forward.1} parent=1 // pred_check
      _
    $region23: #{lstm_forward.1} parent=1 // pred_check_branch
      %25 = sbr.rel (0) target = $region25
    $region24: #{lstm_forward.1} parent=1 // pred_region
      _
    $region25: #{lstm_forward.1} parent=1 // pred_fallthru
      _
    %v26 = vld [vmem:[%s0] sm:$0xff]
    %v27 = vld [vmem:[%s0 + $0x8] sm:$0xff]
    %v28 = vld [vmem:[%s1] sm:$0xff]
    %v29 = vld [vmem:[%s1 + $0x8] sm:$0xff]
    %v30 = vld [vmem:[%s1 + $0x10] sm:$0xff]
    %v31 = vld [vmem:[%s1 + $0x18] sm:$0xff]
    %v32 = vld [vmem:[%s1 + $0x20] sm:$0xff]
    %v33 = vld [vmem:[%s1 + $0x28] sm:$0xff]
    %v34 = vld [vmem:[%s1 + $0x30] sm:$0xff]
    %v35 = vld [vmem:[%s1 + $0x38] sm:$0xff]
    %v36 = vld [vmem:[%s2] sm:$0xf]
    %v38 = vperm.slane %v36, 0
    %v39 = vperm.slane %v36, 1
    %v40 = vperm.slane %v36, 2
    %v41 = vperm.slane %v36, 3
    %vm46 = vcmask 130048
    %v48 = vsel %vm46, %v26, 0
    %v51 = vsel %vm46, %v27, 0
    %53 = vmatpush.msra.mxu0 0.0
    %54 = vmatpush.msra.mxu0 0.0
    %55 = vmatpush.msra.mxu0 0.0
    %56 = vmatpush.msra.mxu0 0.0
    %57 = vmatpush.msra.mxu0 0.0
    %58 = vmatpush.msra.mxu0 0.0
    %59 = vmatpush.msra.mxu0 0.0
    %60 = vmatpush.msra.mxu0 0.0
    %61 = vmatpush.msra.mxu0 0.0
    %62 = vmatpush.msra.mxu0 0.0
    %63 = vmatpush.msra.mxu0 0.0
    %64 = vmatpush.msra.mxu0 0.0
    %65 = vmatpush.msra.mxu0 0.0
    %66 = vmatpush.msra.mxu0 0.0
    %67 = vmatpush.msra.mxu0 %v32
    %68 = vmatpush.msra.mxu0 %v28
    %69 = vmatmul.f32.gmra.mxu0 %v48
    %v70 = vpop.f32.mrf.mxu0
    %v71 = vadd.f32 %v38, %v70
    %72 = vmatmul.f32.gmra.mxu0 %v51
    %v73 = vpop.f32.mrf.mxu0
    %v74 = vadd.f32 %v38, %v73
    %75 = vdwg.mxu0
    %76 = vmatpush.msra.mxu0 0.0
    %77 = vmatpush.msra.mxu0 0.0
    %78 = vmatpush.msra.mxu0 0.0
    %79 = vmatpush.msra.mxu0 0.0
    %80 = vmatpush.msra.mxu0 0.0
    %81 = vmatpush.msra.mxu0 0.0
    %82 = vmatpush.msra.mxu0 0.0
    %83 = vmatpush.msra.mxu0 0.0
    %84 = vmatpush.msra.mxu0 0.0
    %85 = vmatpush.msra.mxu0 0.0
    %86 = vmatpush.msra.mxu0 0.0
    %87 = vmatpush.msra.mxu0 0.0
    %88 = vmatpush.msra.mxu0 0.0
    %89 = vmatpush.msra.mxu0 0.0
    %90 = vmatpush.msra.mxu0 %v33
    %91 = vmatpush.msra.mxu0 %v29
    %92 = vmatmul.f32.gmra.mxu0 %v48
    %v93 = vpop.f32.mrf.mxu0
    %v94 = vadd.f32 %v39, %v93
    %95 = vmatmul.f32.gmra.mxu0 %v51
    %v96 = vpop.f32.mrf.mxu0
    %v97 = vadd.f32 %v39, %v96
    %98 = vdwg.mxu0
    %99 = vmatpush.msra.mxu0 0.0
    %100 = vmatpush.msra.mxu0 0.0
    %101 = vmatpush.msra.mxu0 0.0
    %102 = vmatpush.msra.mxu0 0.0
    %103 = vmatpush.msra.mxu0 0.0
    %104 = vmatpush.msra.mxu0 0.0
    %105 = vmatpush.msra.mxu0 0.0
    %106 = vmatpush.msra.mxu0 0.0
    %107 = vmatpush.msra.mxu0 0.0
    %108 = vmatpush.msra.mxu0 0.0
    %109 = vmatpush.msra.mxu0 0.0
    %110 = vmatpush.msra.mxu0 0.0
    %111 = vmatpush.msra.mxu0 0.0
    %112 = vmatpush.msra.mxu0 0.0
    %113 = vmatpush.msra.mxu0 %v34
    %114 = vmatpush.msra.mxu0 %v30
    %115 = vmatmul.f32.gmra.mxu0 %v48
    %v116 = vpop.f32.mrf.mxu0
    %v117 = vadd.f32 %v40, %v116
    %118 = vmatmul.f32.gmra.mxu0 %v51
    %v119 = vpop.f32.mrf.mxu0
    %v120 = vadd.f32 %v40, %v119
    %121 = vdwg.mxu0
    %122 = vmatpush.msra.mxu0 0.0
    %123 = vmatpush.msra.mxu0 0.0
    %124 = vmatpush.msra.mxu0 0.0
    %125 = vmatpush.msra.mxu0 0.0
    %126 = vmatpush.msra.mxu0 0.0
    %127 = vmatpush.msra.mxu0 0.0
    %128 = vmatpush.msra.mxu0 0.0
    %129 = vmatpush.msra.mxu0 0.0
    %130 = vmatpush.msra.mxu0 0.0
    %131 = vmatpush.msra.mxu0 0.0
    %132 = vmatpush.msra.mxu0 0.0
    %133 = vmatpush.msra.mxu0 0.0
    %134 = vmatpush.msra.mxu0 0.0
    %135 = vmatpush.msra.mxu0 0.0
    %136 = vmatpush.msra.mxu0 %v35
    %137 = vmatpush.msra.mxu0 %v31
    %138 = vmatmul.f32.gmra.mxu0 %v48
    %v139 = vpop.f32.mrf.mxu0
    %v140 = vadd.f32 %v41, %v139
    %141 = vmatmul.f32.gmra.mxu0 %v51
    %v142 = vpop.f32.mrf.mxu0
    %v143 = vadd.f32 %v41, %v142
    %144 = vdwg.mxu0
    %145 = vst [vmem:[#allocation2] sm:$0xff] %v71
    %146 = vst [vmem:[#allocation2 + $0x8] sm:$0xff] %v94
    %147 = vst [vmem:[#allocation2 + $0x10] sm:$0xff] %v117
    %148 = vst [vmem:[#allocation2 + $0x18] sm:$0xff] %v140
    %149 = vst [vmem:[#allocation2 + $0x20] sm:$0xff] %v74
    %150 = vst [vmem:[#allocation2 + $0x28] sm:$0xff] %v97
    %151 = vst [vmem:[#allocation2 + $0x30] sm:$0xff] %v120
    %152 = vst [vmem:[#allocation2 + $0x38] sm:$0xff] %v143
    %v153 = vlaneseq
    %v154 = vand.u32 %v153, 127
    %vm155 = vcmp.lt.s32.totalorder %v154, 64
    %v156 = vld [vmem:[#allocation2] ss:$8 sm:$0xf]
    %v157 = vxor.u32 %v156, 2147483648
    %v158 = vmul.f32 %v157, 1.442695
    %v159 = vpow.pop %v158
    %v160 = vadd.f32 %v159, 1.0
    %v161 = vrcp.pop %v160
    %v162 = vmul.f32 %v160, %v161
    %v163 = vsub.f32 1.0, %v162
    %v164 = vmul.f32 %v161, %v163
    %v165 = vadd.f32 %v161, %v164
    %vm166 = vweird.f32 %v160
    %vm167 = vweird.f32 %v161
    %vm168 = vmor %vm166, %vm167
    %v169 = vsel %vm168, %v161, %v165
    %v170 = vand.u32 2147483647, %v160
    %vm171 = vcmp.eq.f32.partialorder %v170, 8.507059e+37
    %v172 = vand.u32 %v160, 2147483648
    %v173 = vor.u32 1.1754944e-38, %v172
    %v174 = vsel %vm171, %v173, %v169
    %v175 = vmul.f32 1.0, %v174
    %v177 = vrot.slane %v175, 2
    %v179 = vmul.f32 %v177, 2.0
    %v180 = vsub.f32 %v179, 1.0
    %v181 = vrot.slane %v175, 1
    %v183 = vmul.f32 %v181, 0.0
    %v184 = vmul.f32 %v175, %v180
    %v185 = vadd.f32 %v183, %v184
    %v186 = vtanh.pop %v185
    %v187 = vrot.slane %v175, 3
    %v189 = vmul.f32 %v187, %v186
    %v190 = vsel %vm155, %v185, 0.0
    %v191 = vsel %vm155, %v189, 0.0
    %s192 = scalar_lea.vmem [#allocation2], 1
    %v193 = vld [vmem:[%s192] ss:$8 sm:$0xf]
    %v194 = vld [vmem:[%s3] sm:$0xff]
    %v195 = vld [vmem:[%s3 + $0x8] sm:$0xff]
    %v196 = vld [vmem:[%s3 + $0x10] sm:$0xff]
    %v197 = vld [vmem:[%s3 + $0x18] sm:$0xff]
    %v198 = vld [vmem:[%s3 + $0x20] sm:$0xff]
    %v199 = vld [vmem:[%s3 + $0x28] sm:$0xff]
    %v200 = vld [vmem:[%s3 + $0x30] sm:$0xff]
    %v201 = vld [vmem:[%s3 + $0x38] sm:$0xff]
    %v202 = vld [vmem:[%s3 + $0x40] sm:$0xff]
    %v203 = vld [vmem:[%s3 + $0x48] sm:$0xff]
    %v204 = vld [vmem:[%s3 + $0x50] sm:$0xff]
    %v205 = vld [vmem:[%s3 + $0x58] sm:$0xff]
    %v206 = vld [vmem:[%s3 + $0x60] sm:$0xff]
    %v207 = vld [vmem:[%s3 + $0x68] sm:$0xff]
    %v208 = vld [vmem:[%s3 + $0x70] sm:$0xff]
    %v209 = vld [vmem:[%s3 + $0x78] sm:$0xff]
    %v210 = vld [vmem:[%s3 + $0x80] sm:$0xff]
    %v211 = vld [vmem:[%s3 + $0x88] sm:$0xff]
    %v212 = vld [vmem:[%s3 + $0x90] sm:$0xff]
    %v213 = vld [vmem:[%s3 + $0x98] sm:$0xff]
    %v214 = vld [vmem:[%s3 + $0xa0] sm:$0xff]
    %v215 = vld [vmem:[%s3 + $0xa8] sm:$0xff]
    %v216 = vld [vmem:[%s3 + $0xb0] sm:$0xff]
    %v217 = vld [vmem:[%s3 + $0xb8] sm:$0xff]
    %v218 = vld [vmem:[%s3 + $0xc0] sm:$0xff]
    %v219 = vld [vmem:[%s3 + $0xc8] sm:$0xff]
    %v220 = vld [vmem:[%s3 + $0xd0] sm:$0xff]
    %v221 = vld [vmem:[%s3 + $0xd8] sm:$0xff]
    %v222 = vld [vmem:[%s3 + $0xe0] sm:$0xff]
    %v223 = vld [vmem:[%s3 + $0xe8] sm:$0xff]
    %v224 = vld [vmem:[%s3 + $0xf0] sm:$0xff]
    %v225 = vld [vmem:[%s3 + $0xf8] sm:$0xff]
    %v226 = vld [vmem:[%s3 + $0x100] sm:$0xff]
    %v227 = vld [vmem:[%s3 + $0x108] sm:$0xff]
    %v228 = vld [vmem:[%s3 + $0x110] sm:$0xff]
    %v229 = vld [vmem:[%s3 + $0x118] sm:$0xff]
    %v230 = vld [vmem:[%s3 + $0x120] sm:$0xff]
    %v231 = vld [vmem:[%s3 + $0x128] sm:$0xff]
    %v232 = vld [vmem:[%s3 + $0x130] sm:$0xff]
    %v233 = vld [vmem:[%s3 + $0x138] sm:$0xff]
    %v234 = vld [vmem:[%s3 + $0x140] sm:$0xff]
    %v235 = vld [vmem:[%s3 + $0x148] sm:$0xff]
    %v236 = vld [vmem:[%s3 + $0x150] sm:$0xff]
    %v237 = vld [vmem:[%s3 + $0x158] sm:$0xff]
    %v238 = vld [vmem:[%s3 + $0x160] sm:$0xff]
    %v239 = vld [vmem:[%s3 + $0x168] sm:$0xff]
    %v240 = vld [vmem:[%s3 + $0x170] sm:$0xff]
    %v241 = vld [vmem:[%s3 + $0x178] sm:$0xff]
    %v242 = vld [vmem:[%s3 + $0x180] sm:$0xff]
    %v243 = vld [vmem:[%s3 + $0x188] sm:$0xff]
    %v244 = vld [vmem:[%s3 + $0x190] sm:$0xff]
    %v245 = vld [vmem:[%s3 + $0x198] sm:$0xff]
    %v246 = vld [vmem:[%s3 + $0x1a0] sm:$0xff]
    %v247 = vld [vmem:[%s3 + $0x1a8] sm:$0xff]
    %v248 = vld [vmem:[%s3 + $0x1b0] sm:$0xff]
    %v249 = vld [vmem:[%s3 + $0x1b8] sm:$0xff]
    %v250 = vld [vmem:[%s3 + $0x1c0] sm:$0xff]
    %v251 = vld [vmem:[%s3 + $0x1c8] sm:$0xff]
    %v252 = vld [vmem:[%s3 + $0x1d0] sm:$0xff]
    %v253 = vld [vmem:[%s3 + $0x1d8] sm:$0xff]
    %v254 = vld [vmem:[%s3 + $0x1e0] sm:$0xff]
    %v255 = vld [vmem:[%s3 + $0x1e8] sm:$0xff]
    %v256 = vld [vmem:[%s3 + $0x1f0] sm:$0xff]
    %v257 = vld [vmem:[%s3 + $0x1f8] sm:$0xff]
    %258 = vmatpush.msra.mxu0 %v254
    %259 = vmatpush.msra.mxu0 %v250
    %260 = vmatpush.msra.mxu0 %v246
    %261 = vmatpush.msra.mxu0 %v242
    %262 = vmatpush.msra.mxu0 %v238
    %263 = vmatpush.msra.mxu0 %v234
    %264 = vmatpush.msra.mxu0 %v230
    %265 = vmatpush.msra.mxu0 %v226
    %266 = vmatpush.msra.mxu0 %v222
    %267 = vmatpush.msra.mxu0 %v218
    %268 = vmatpush.msra.mxu0 %v214
    %269 = vmatpush.msra.mxu0 %v210
    %270 = vmatpush.msra.mxu0 %v206
    %271 = vmatpush.msra.mxu0 %v202
    %272 = vmatpush.msra.mxu0 %v198
    %273 = vmatpush.msra.mxu0 %v194
    %274 = vmatmul.f32.gmra.mxu0 %v191
    %v275 = vpop.f32.mrf.mxu0
    %v276 = vadd.f32 0.0, %v275
    %277 = vdwg.mxu0
    %278 = vmatpush.msra.mxu0 %v255
    %279 = vmatpush.msra.mxu0 %v251
    %280 = vmatpush.msra.mxu0 %v247
    %281 = vmatpush.msra.mxu0 %v243
    %282 = vmatpush.msra.mxu0 %v239
    %283 = vmatpush.msra.mxu0 %v235
    %284 = vmatpush.msra.mxu0 %v231
    %285 = vmatpush.msra.mxu0 %v227
    %286 = vmatpush.msra.mxu0 %v223
    %287 = vmatpush.msra.mxu0 %v219
    %288 = vmatpush.msra.mxu0 %v215
    %289 = vmatpush.msra.mxu0 %v211
    %290 = vmatpush.msra.mxu0 %v207
    %291 = vmatpush.msra.mxu0 %v203
    %292 = vmatpush.msra.mxu0 %v199
    %293 = vmatpush.msra.mxu0 %v195
    %294 = vmatmul.f32.gmra.mxu0 %v191
    %v295 = vpop.f32.mrf.mxu0
    %v296 = vadd.f32 0.0, %v295
    %297 = vdwg.mxu0
    %298 = vmatpush.msra.mxu0 %v256
    %299 = vmatpush.msra.mxu0 %v252
    %300 = vmatpush.msra.mxu0 %v248
    %301 = vmatpush.msra.mxu0 %v244
    %302 = vmatpush.msra.mxu0 %v240
    %303 = vmatpush.msra.mxu0 %v236
    %304 = vmatpush.msra.mxu0 %v232
    %305 = vmatpush.msra.mxu0 %v228
    %306 = vmatpush.msra.mxu0 %v224
    %307 = vmatpush.msra.mxu0 %v220
    %308 = vmatpush.msra.mxu0 %v216
    %309 = vmatpush.msra.mxu0 %v212
    %310 = vmatpush.msra.mxu0 %v208
    %311 = vmatpush.msra.mxu0 %v204
    %312 = vmatpush.msra.mxu0 %v200
    %313 = vmatpush.msra.mxu0 %v196
    %314 = vmatmul.f32.gmra.mxu0 %v191
    %v315 = vpop.f32.mrf.mxu0
    %v316 = vadd.f32 0.0, %v315
    %317 = vdwg.mxu0
    %318 = vmatpush.msra.mxu0 %v257
    %319 = vmatpush.msra.mxu0 %v253
    %320 = vmatpush.msra.mxu0 %v249
    %321 = vmatpush.msra.mxu0 %v245
    %322 = vmatpush.msra.mxu0 %v241
    %323 = vmatpush.msra.mxu0 %v237
    %324 = vmatpush.msra.mxu0 %v233
    %325 = vmatpush.msra.mxu0 %v229
    %326 = vmatpush.msra.mxu0 %v225
    %327 = vmatpush.msra.mxu0 %v221
    %328 = vmatpush.msra.mxu0 %v217
    %329 = vmatpush.msra.mxu0 %v213
    %330 = vmatpush.msra.mxu0 %v209
    %331 = vmatpush.msra.mxu0 %v205
    %332 = vmatpush.msra.mxu0 %v201
    %333 = vmatpush.msra.mxu0 %v197
    %334 = vmatmul.f32.gmra.mxu0 %v191
    %v335 = vpop.f32.mrf.mxu0
    %v336 = vadd.f32 0.0, %v335
    %337 = vdwg.mxu0
    %v342 = vrot.slane %v296, 7
    %v343 = vrot.slane %v316, 6
    %v344 = vrot.slane %v336, 5
    %vm345 = vcmask 1040384
    %v346 = vsel %vm345, %v276, %v342
    %vm347 = vcmask 1042434
    %v348 = vsel %vm347, %v343, %v344
    %vm349 = vcmask 1041408
    %v350 = vsel %vm349, %v346, %v348
    %v352 = vadd.f32 %v193, %v350
    %v353 = vxor.u32 %v352, 2147483648
    %v354 = vmul.f32 %v353, 1.442695
    %v355 = vpow.pop %v354
    %v356 = vadd.f32 %v355, 1.0
    %v357 = vrcp.pop %v356
    %v358 = vmul.f32 %v356, %v357
    %v359 = vsub.f32 1.0, %v358
    %v360 = vmul.f32 %v357, %v359
    %v361 = vadd.f32 %v357, %v360
    %vm362 = vweird.f32 %v356
    %vm363 = vweird.f32 %v357
    %vm364 = vmor %vm362, %vm363
    %v365 = vsel %vm364, %v357, %v361
    %v366 = vand.u32 2147483647, %v356
    %vm367 = vcmp.eq.f32.partialorder %v366, 8.507059e+37
    %v368 = vand.u32 %v356, 2147483648
    %v369 = vor.u32 1.1754944e-38, %v368
    %v370 = vsel %vm367, %v369, %v365
    %v371 = vmul.f32 1.0, %v370
    %v373 = vrot.slane %v371, 2
    %v375 = vmul.f32 %v373, 2.0
    %v376 = vsub.f32 %v375, 1.0
    %v377 = vrot.slane %v371, 1
    %v379 = vmul.f32 %v377, %v190
    %v380 = vmul.f32 %v371, %v376
    %v381 = vadd.f32 %v379, %v380
    %v382 = vtanh.pop %v381
    %v383 = vrot.slane %v371, 3
    %v385 = vmul.f32 %v383, %v382
    %s386 = scalar_lea.vmem [#allocation2], 2
    %v387 = vld [vmem:[%s386] ss:$8 sm:$0xf]
    %388 = vmatpush.msra.mxu0 %v254
    %389 = vmatpush.msra.mxu0 %v250
    %390 = vmatpush.msra.mxu0 %v246
    %391 = vmatpush.msra.mxu0 %v242
    %392 = vmatpush.msra.mxu0 %v238
    %393 = vmatpush.msra.mxu0 %v234
    %394 = vmatpush.msra.mxu0 %v230
    %395 = vmatpush.msra.mxu0 %v226
    %396 = vmatpush.msra.mxu0 %v222
    %397 = vmatpush.msra.mxu0 %v218
    %398 = vmatpush.msra.mxu0 %v214
    %399 = vmatpush.msra.mxu0 %v210
    %400 = vmatpush.msra.mxu0 %v206
    %401 = vmatpush.msra.mxu0 %v202
    %402 = vmatpush.msra.mxu0 %v198
    %403 = vmatpush.msra.mxu0 %v194
    %404 = vmatmul.f32.gmra.mxu0 %v385
    %v405 = vpop.f32.mrf.mxu0
    %v406 = vadd.f32 0.0, %v405
    %407 = vdwg.mxu0
    %408 = vmatpush.msra.mxu0 %v255
    %409 = vmatpush.msra.mxu0 %v251
    %410 = vmatpush.msra.mxu0 %v247
    %411 = vmatpush.msra.mxu0 %v243
    %412 = vmatpush.msra.mxu0 %v239
    %413 = vmatpush.msra.mxu0 %v235
    %414 = vmatpush.msra.mxu0 %v231
    %415 = vmatpush.msra.mxu0 %v227
    %416 = vmatpush.msra.mxu0 %v223
    %417 = vmatpush.msra.mxu0 %v219
    %418 = vmatpush.msra.mxu0 %v215
    %419 = vmatpush.msra.mxu0 %v211
    %420 = vmatpush.msra.mxu0 %v207
    %421 = vmatpush.msra.mxu0 %v203
    %422 = vmatpush.msra.mxu0 %v199
    %423 = vmatpush.msra.mxu0 %v195
    %424 = vmatmul.f32.gmra.mxu0 %v385
    %v425 = vpop.f32.mrf.mxu0
    %v426 = vadd.f32 0.0, %v425
    %427 = vdwg.mxu0
    %428 = vmatpush.msra.mxu0 %v256
    %429 = vmatpush.msra.mxu0 %v252
    %430 = vmatpush.msra.mxu0 %v248
    %431 = vmatpush.msra.mxu0 %v244
    %432 = vmatpush.msra.mxu0 %v240
    %433 = vmatpush.msra.mxu0 %v236
    %434 = vmatpush.msra.mxu0 %v232
    %435 = vmatpush.msra.mxu0 %v228
    %436 = vmatpush.msra.mxu0 %v224
    %437 = vmatpush.msra.mxu0 %v220
    %438 = vmatpush.msra.mxu0 %v216
    %439 = vmatpush.msra.mxu0 %v212
    %440 = vmatpush.msra.mxu0 %v208
    %441 = vmatpush.msra.mxu0 %v204
    %442 = vmatpush.msra.mxu0 %v200
    %443 = vmatpush.msra.mxu0 %v196
    %444 = vmatmul.f32.gmra.mxu0 %v385
    %v445 = vpop.f32.mrf.mxu0
    %v446 = vadd.f32 0.0, %v445
    %447 = vdwg.mxu0
    %448 = vmatpush.msra.mxu0 %v257
    %449 = vmatpush.msra.mxu0 %v253
    %450 = vmatpush.msra.mxu0 %v249
    %451 = vmatpush.msra.mxu0 %v245
    %452 = vmatpush.msra.mxu0 %v241
    %453 = vmatpush.msra.mxu0 %v237
    %454 = vmatpush.msra.mxu0 %v233
    %455 = vmatpush.msra.mxu0 %v229
    %456 = vmatpush.msra.mxu0 %v225
    %457 = vmatpush.msra.mxu0 %v221
    %458 = vmatpush.msra.mxu0 %v217
    %459 = vmatpush.msra.mxu0 %v213
    %460 = vmatpush.msra.mxu0 %v209
    %461 = vmatpush.msra.mxu0 %v205
    %462 = vmatpush.msra.mxu0 %v201
    %463 = vmatpush.msra.mxu0 %v197
    %464 = vmatmul.f32.gmra.mxu0 %v385
    %v465 = vpop.f32.mrf.mxu0
    %v466 = vadd.f32 0.0, %v465
    %467 = vdwg.mxu0
    %v472 = vrot.slane %v426, 7
    %v473 = vrot.slane %v446, 6
    %v474 = vrot.slane %v466, 5
    %v475 = vsel %vm345, %v406, %v472
    %v476 = vsel %vm347, %v473, %v474
    %v477 = vsel %vm349, %v475, %v476
    %v479 = vadd.f32 %v387, %v477
    %v480 = vxor.u32 %v479, 2147483648
    %v481 = vmul.f32 %v480, 1.442695
    %v482 = vpow.pop %v481
    %v483 = vadd.f32 %v482, 1.0
    %v484 = vrcp.pop %v483
    %v485 = vmul.f32 %v483, %v484
    %v486 = vsub.f32 1.0, %v485
    %v487 = vmul.f32 %v484, %v486
    %v488 = vadd.f32 %v484, %v487
    %vm489 = vweird.f32 %v483
    %vm490 = vweird.f32 %v484
    %vm491 = vmor %vm489, %vm490
    %v492 = vsel %vm491, %v484, %v488
    %v493 = vand.u32 2147483647, %v483
    %vm494 = vcmp.eq.f32.partialorder %v493, 8.507059e+37
    %v495 = vand.u32 %v483, 2147483648
    %v496 = vor.u32 1.1754944e-38, %v495
    %v497 = vsel %vm494, %v496, %v492
    %v498 = vmul.f32 1.0, %v497
    %v500 = vrot.slane %v498, 2
    %v502 = vmul.f32 %v500, 2.0
    %v503 = vsub.f32 %v502, 1.0
    %v504 = vrot.slane %v498, 1
    %v506 = vmul.f32 %v504, %v381
    %v507 = vmul.f32 %v498, %v503
    %v508 = vadd.f32 %v506, %v507
    %v509 = vtanh.pop %v508
    %v510 = vrot.slane %v498, 3
    %v512 = vmul.f32 %v510, %v509
    %s513 = scalar_lea.vmem [#allocation2], 3
    %v514 = vld [vmem:[%s513] ss:$8 sm:$0xf]
    %515 = vmatpush.msra.mxu0 %v254
    %516 = vmatpush.msra.mxu0 %v250
    %517 = vmatpush.msra.mxu0 %v246
    %518 = vmatpush.msra.mxu0 %v242
    %519 = vmatpush.msra.mxu0 %v238
    %520 = vmatpush.msra.mxu0 %v234
    %521 = vmatpush.msra.mxu0 %v230
    %522 = vmatpush.msra.mxu0 %v226
    %523 = vmatpush.msra.mxu0 %v222
    %524 = vmatpush.msra.mxu0 %v218
    %525 = vmatpush.msra.mxu0 %v214
    %526 = vmatpush.msra.mxu0 %v210
    %527 = vmatpush.msra.mxu0 %v206
    %528 = vmatpush.msra.mxu0 %v202
    %529 = vmatpush.msra.mxu0 %v198
    %530 = vmatpush.msra.mxu0 %v194
    %531 = vmatmul.f32.gmra.mxu0 %v512
    %v532 = vpop.f32.mrf.mxu0
    %v533 = vadd.f32 0.0, %v532
    %534 = vdwg.mxu0
    %535 = vmatpush.msra.mxu0 %v255
    %536 = vmatpush.msra.mxu0 %v251
    %537 = vmatpush.msra.mxu0 %v247
    %538 = vmatpush.msra.mxu0 %v243
    %539 = vmatpush.msra.mxu0 %v239
    %540 = vmatpush.msra.mxu0 %v235
    %541 = vmatpush.msra.mxu0 %v231
    %542 = vmatpush.msra.mxu0 %v227
    %543 = vmatpush.msra.mxu0 %v223
    %544 = vmatpush.msra.mxu0 %v219
    %545 = vmatpush.msra.mxu0 %v215
    %546 = vmatpush.msra.mxu0 %v211
    %547 = vmatpush.msra.mxu0 %v207
    %548 = vmatpush.msra.mxu0 %v203
    %549 = vmatpush.msra.mxu0 %v199
    %550 = vmatpush.msra.mxu0 %v195
    %551 = vmatmul.f32.gmra.mxu0 %v512
    %v552 = vpop.f32.mrf.mxu0
    %v553 = vadd.f32 0.0, %v552
    %554 = vdwg.mxu0
    %555 = vmatpush.msra.mxu0 %v256
    %556 = vmatpush.msra.mxu0 %v252
    %557 = vmatpush.msra.mxu0 %v248
    %558 = vmatpush.msra.mxu0 %v244
    %559 = vmatpush.msra.mxu0 %v240
    %560 = vmatpush.msra.mxu0 %v236
    %561 = vmatpush.msra.mxu0 %v232
    %562 = vmatpush.msra.mxu0 %v228
    %563 = vmatpush.msra.mxu0 %v224
    %564 = vmatpush.msra.mxu0 %v220
    %565 = vmatpush.msra.mxu0 %v216
    %566 = vmatpush.msra.mxu0 %v212
    %567 = vmatpush.msra.mxu0 %v208
    %568 = vmatpush.msra.mxu0 %v204
    %569 = vmatpush.msra.mxu0 %v200
    %570 = vmatpush.msra.mxu0 %v196
    %571 = vmatmul.f32.gmra.mxu0 %v512
    %v572 = vpop.f32.mrf.mxu0
    %v573 = vadd.f32 0.0, %v572
    %574 = vdwg.mxu0
    %575 = vmatpush.msra.mxu0 %v257
    %576 = vmatpush.msra.mxu0 %v253
    %577 = vmatpush.msra.mxu0 %v249
    %578 = vmatpush.msra.mxu0 %v245
    %579 = vmatpush.msra.mxu0 %v241
    %580 = vmatpush.msra.mxu0 %v237
    %581 = vmatpush.msra.mxu0 %v233
    %582 = vmatpush.msra.mxu0 %v229
    %583 = vmatpush.msra.mxu0 %v225
    %584 = vmatpush.msra.mxu0 %v221
    %585 = vmatpush.msra.mxu0 %v217
    %586 = vmatpush.msra.mxu0 %v213
    %587 = vmatpush.msra.mxu0 %v209
    %588 = vmatpush.msra.mxu0 %v205
    %589 = vmatpush.msra.mxu0 %v201
    %590 = vmatpush.msra.mxu0 %v197
    %591 = vmatmul.f32.gmra.mxu0 %v512
    %v592 = vpop.f32.mrf.mxu0
    %v593 = vadd.f32 0.0, %v592
    %594 = vdwg.mxu0
    %v599 = vrot.slane %v553, 7
    %v600 = vrot.slane %v573, 6
    %v601 = vrot.slane %v593, 5
    %v602 = vsel %vm345, %v533, %v599
    %v603 = vsel %vm347, %v600, %v601
    %v604 = vsel %vm349, %v602, %v603
    %v606 = vadd.f32 %v514, %v604
    %v607 = vxor.u32 %v606, 2147483648
    %v608 = vmul.f32 %v607, 1.442695
    %v609 = vpow.pop %v608
    %v610 = vadd.f32 %v609, 1.0
    %v611 = vrcp.pop %v610
    %v612 = vmul.f32 %v610, %v611
    %v613 = vsub.f32 1.0, %v612
    %v614 = vmul.f32 %v611, %v613
    %v615 = vadd.f32 %v611, %v614
    %vm616 = vweird.f32 %v610
    %vm617 = vweird.f32 %v611
    %vm618 = vmor %vm616, %vm617
    %v619 = vsel %vm618, %v611, %v615
    %v620 = vand.u32 2147483647, %v610
    %vm621 = vcmp.eq.f32.partialorder %v620, 8.507059e+37
    %v622 = vand.u32 %v610, 2147483648
    %v623 = vor.u32 1.1754944e-38, %v622
    %v624 = vsel %vm621, %v623, %v619
    %v625 = vmul.f32 1.0, %v624
    %v627 = vrot.slane %v625, 2
    %v629 = vmul.f32 %v627, 2.0
    %v630 = vsub.f32 %v629, 1.0
    %v631 = vrot.slane %v625, 1
    %v633 = vmul.f32 %v631, %v508
    %v634 = vmul.f32 %v625, %v630
    %v635 = vadd.f32 %v633, %v634
    %v636 = vtanh.pop %v635
    %v637 = vrot.slane %v625, 3
    %v639 = vmul.f32 %v637, %v636
    %s640 = scalar_lea.vmem [#allocation2], 4
    %v641 = vld [vmem:[%s640] ss:$8 sm:$0xf]
    %642 = vmatpush.msra.mxu0 %v254
    %643 = vmatpush.msra.mxu0 %v250
    %644 = vmatpush.msra.mxu0 %v246
    %645 = vmatpush.msra.mxu0 %v242
    %646 = vmatpush.msra.mxu0 %v238
    %647 = vmatpush.msra.mxu0 %v234
    %648 = vmatpush.msra.mxu0 %v230
    %649 = vmatpush.msra.mxu0 %v226
    %650 = vmatpush.msra.mxu0 %v222
    %651 = vmatpush.msra.mxu0 %v218
    %652 = vmatpush.msra.mxu0 %v214
    %653 = vmatpush.msra.mxu0 %v210
    %654 = vmatpush.msra.mxu0 %v206
    %655 = vmatpush.msra.mxu0 %v202
    %656 = vmatpush.msra.mxu0 %v198
    %657 = vmatpush.msra.mxu0 %v194
    %658 = vmatmul.f32.gmra.mxu0 %v639
    %v659 = vpop.f32.mrf.mxu0
    %v660 = vadd.f32 0.0, %v659
    %661 = vdwg.mxu0
    %662 = vmatpush.msra.mxu0 %v255
    %663 = vmatpush.msra.mxu0 %v251
    %664 = vmatpush.msra.mxu0 %v247
    %665 = vmatpush.msra.mxu0 %v243
    %666 = vmatpush.msra.mxu0 %v239
    %667 = vmatpush.msra.mxu0 %v235
    %668 = vmatpush.msra.mxu0 %v231
    %669 = vmatpush.msra.mxu0 %v227
    %670 = vmatpush.msra.mxu0 %v223
    %671 = vmatpush.msra.mxu0 %v219
    %672 = vmatpush.msra.mxu0 %v215
    %673 = vmatpush.msra.mxu0 %v211
    %674 = vmatpush.msra.mxu0 %v207
    %675 = vmatpush.msra.mxu0 %v203
    %676 = vmatpush.msra.mxu0 %v199
    %677 = vmatpush.msra.mxu0 %v195
    %678 = vmatmul.f32.gmra.mxu0 %v639
    %v679 = vpop.f32.mrf.mxu0
    %v680 = vadd.f32 0.0, %v679
    %681 = vdwg.mxu0
    %682 = vmatpush.msra.mxu0 %v256
    %683 = vmatpush.msra.mxu0 %v252
    %684 = vmatpush.msra.mxu0 %v248
    %685 = vmatpush.msra.mxu0 %v244
    %686 = vmatpush.msra.mxu0 %v240
    %687 = vmatpush.msra.mxu0 %v236
    %688 = vmatpush.msra.mxu0 %v232
    %689 = vmatpush.msra.mxu0 %v228
    %690 = vmatpush.msra.mxu0 %v224
    %691 = vmatpush.msra.mxu0 %v220
    %692 = vmatpush.msra.mxu0 %v216
    %693 = vmatpush.msra.mxu0 %v212
    %694 = vmatpush.msra.mxu0 %v208
    %695 = vmatpush.msra.mxu0 %v204
    %696 = vmatpush.msra.mxu0 %v200
    %697 = vmatpush.msra.mxu0 %v196
    %698 = vmatmul.f32.gmra.mxu0 %v639
    %v699 = vpop.f32.mrf.mxu0
    %v700 = vadd.f32 0.0, %v699
    %701 = vdwg.mxu0
    %702 = vmatpush.msra.mxu0 %v257
    %703 = vmatpush.msra.mxu0 %v253
    %704 = vmatpush.msra.mxu0 %v249
    %705 = vmatpush.msra.mxu0 %v245
    %706 = vmatpush.msra.mxu0 %v241
    %707 = vmatpush.msra.mxu0 %v237
    %708 = vmatpush.msra.mxu0 %v233
    %709 = vmatpush.msra.mxu0 %v229
    %710 = vmatpush.msra.mxu0 %v225
    %711 = vmatpush.msra.mxu0 %v221
    %712 = vmatpush.msra.mxu0 %v217
    %713 = vmatpush.msra.mxu0 %v213
    %714 = vmatpush.msra.mxu0 %v209
    %715 = vmatpush.msra.mxu0 %v205
    %716 = vmatpush.msra.mxu0 %v201
    %717 = vmatpush.msra.mxu0 %v197
    %718 = vmatmul.f32.gmra.mxu0 %v639
    %v719 = vpop.f32.mrf.mxu0
    %v720 = vadd.f32 0.0, %v719
    %721 = vdwg.mxu0
    %v726 = vrot.slane %v680, 7
    %v727 = vrot.slane %v700, 6
    %v728 = vrot.slane %v720, 5
    %v729 = vsel %vm345, %v660, %v726
    %v730 = vsel %vm347, %v727, %v728
    %v731 = vsel %vm349, %v729, %v730
    %v733 = vadd.f32 %v641, %v731
    %v734 = vxor.u32 %v733, 2147483648
    %v735 = vmul.f32 %v734, 1.442695
    %v736 = vpow.pop %v735
    %v737 = vadd.f32 %v736, 1.0
    %v738 = vrcp.pop %v737
    %v739 = vmul.f32 %v737, %v738
    %v740 = vsub.f32 1.0, %v739
    %v741 = vmul.f32 %v738, %v740
    %v742 = vadd.f32 %v738, %v741
    %vm743 = vweird.f32 %v737
    %vm744 = vweird.f32 %v738
    %vm745 = vmor %vm743, %vm744
    %v746 = vsel %vm745, %v738, %v742
    %v747 = vand.u32 2147483647, %v737
    %vm748 = vcmp.eq.f32.partialorder %v747, 8.507059e+37
    %v749 = vand.u32 %v737, 2147483648
    %v750 = vor.u32 1.1754944e-38, %v749
    %v751 = vsel %vm748, %v750, %v746
    %v752 = vmul.f32 1.0, %v751
    %v754 = vrot.slane %v752, 2
    %v756 = vmul.f32 %v754, 2.0
    %v757 = vsub.f32 %v756, 1.0
    %v758 = vrot.slane %v752, 1
    %v760 = vmul.f32 %v758, %v635
    %v761 = vmul.f32 %v752, %v757
    %v762 = vadd.f32 %v760, %v761
    %v763 = vtanh.pop %v762
    %v764 = vrot.slane %v752, 3
    %v766 = vmul.f32 %v764, %v763
    %s767 = scalar_lea.vmem [#allocation2], 5
    %v768 = vld [vmem:[%s767] ss:$8 sm:$0xf]
    %769 = vmatpush.msra.mxu0 %v254
    %770 = vmatpush.msra.mxu0 %v250
    %771 = vmatpush.msra.mxu0 %v246
    %772 = vmatpush.msra.mxu0 %v242
    %773 = vmatpush.msra.mxu0 %v238
    %774 = vmatpush.msra.mxu0 %v234
    %775 = vmatpush.msra.mxu0 %v230
    %776 = vmatpush.msra.mxu0 %v226
    %777 = vmatpush.msra.mxu0 %v222
    %778 = vmatpush.msra.mxu0 %v218
    %779 = vmatpush.msra.mxu0 %v214
    %780 = vmatpush.msra.mxu0 %v210
    %781 = vmatpush.msra.mxu0 %v206
    %782 = vmatpush.msra.mxu0 %v202
    %783 = vmatpush.msra.mxu0 %v198
    %784 = vmatpush.msra.mxu0 %v194
    %785 = vmatmul.f32.gmra.mxu0 %v766
    %v786 = vpop.f32.mrf.mxu0
    %v787 = vadd.f32 0.0, %v786
    %788 = vdwg.mxu0
    %789 = vmatpush.msra.mxu0 %v255
    %790 = vmatpush.msra.mxu0 %v251
    %791 = vmatpush.msra.mxu0 %v247
    %792 = vmatpush.msra.mxu0 %v243
    %793 = vmatpush.msra.mxu0 %v239
    %794 = vmatpush.msra.mxu0 %v235
    %795 = vmatpush.msra.mxu0 %v231
    %796 = vmatpush.msra.mxu0 %v227
    %797 = vmatpush.msra.mxu0 %v223
    %798 = vmatpush.msra.mxu0 %v219
    %799 = vmatpush.msra.mxu0 %v215
    %800 = vmatpush.msra.mxu0 %v211
    %801 = vmatpush.msra.mxu0 %v207
    %802 = vmatpush.msra.mxu0 %v203
    %803 = vmatpush.msra.mxu0 %v199
    %804 = vmatpush.msra.mxu0 %v195
    %805 = vmatmul.f32.gmra.mxu0 %v766
    %v806 = vpop.f32.mrf.mxu0
    %v807 = vadd.f32 0.0, %v806
    %808 = vdwg.mxu0
    %809 = vmatpush.msra.mxu0 %v256
    %810 = vmatpush.msra.mxu0 %v252
    %811 = vmatpush.msra.mxu0 %v248
    %812 = vmatpush.msra.mxu0 %v244
    %813 = vmatpush.msra.mxu0 %v240
    %814 = vmatpush.msra.mxu0 %v236
    %815 = vmatpush.msra.mxu0 %v232
    %816 = vmatpush.msra.mxu0 %v228
    %817 = vmatpush.msra.mxu0 %v224
    %818 = vmatpush.msra.mxu0 %v220
    %819 = vmatpush.msra.mxu0 %v216
    %820 = vmatpush.msra.mxu0 %v212
    %821 = vmatpush.msra.mxu0 %v208
    %822 = vmatpush.msra.mxu0 %v204
    %823 = vmatpush.msra.mxu0 %v200
    %824 = vmatpush.msra.mxu0 %v196
    %825 = vmatmul.f32.gmra.mxu0 %v766
    %v826 = vpop.f32.mrf.mxu0
    %v827 = vadd.f32 0.0, %v826
    %828 = vdwg.mxu0
    %829 = vmatpush.msra.mxu0 %v257
    %830 = vmatpush.msra.mxu0 %v253
    %831 = vmatpush.msra.mxu0 %v249
    %832 = vmatpush.msra.mxu0 %v245
    %833 = vmatpush.msra.mxu0 %v241
    %834 = vmatpush.msra.mxu0 %v237
    %835 = vmatpush.msra.mxu0 %v233
    %836 = vmatpush.msra.mxu0 %v229
    %837 = vmatpush.msra.mxu0 %v225
    %838 = vmatpush.msra.mxu0 %v221
    %839 = vmatpush.msra.mxu0 %v217
    %840 = vmatpush.msra.mxu0 %v213
    %841 = vmatpush.msra.mxu0 %v209
    %842 = vmatpush.msra.mxu0 %v205
    %843 = vmatpush.msra.mxu0 %v201
    %844 = vmatpush.msra.mxu0 %v197
    %845 = vmatmul.f32.gmra.mxu0 %v766
    %v846 = vpop.f32.mrf.mxu0
    %v847 = vadd.f32 0.0, %v846
    %848 = vdwg.mxu0
    %v853 = vrot.slane %v807, 7
    %v854 = vrot.slane %v827, 6
    %v855 = vrot.slane %v847, 5
    %v856 = vsel %vm345, %v787, %v853
    %v857 = vsel %vm347, %v854, %v855
    %v858 = vsel %vm349, %v856, %v857
    %v860 = vadd.f32 %v768, %v858
    %v861 = vxor.u32 %v860, 2147483648
    %v862 = vmul.f32 %v861, 1.442695
    %v863 = vpow.pop %v862
    %v864 = vadd.f32 %v863, 1.0
    %v865 = vrcp.pop %v864
    %v866 = vmul.f32 %v864, %v865
    %v867 = vsub.f32 1.0, %v866
    %v868 = vmul.f32 %v865, %v867
    %v869 = vadd.f32 %v865, %v868
    %vm870 = vweird.f32 %v864
    %vm871 = vweird.f32 %v865
    %vm872 = vmor %vm870, %vm871
    %v873 = vsel %vm872, %v865, %v869
    %v874 = vand.u32 2147483647, %v864
    %vm875 = vcmp.eq.f32.partialorder %v874, 8.507059e+37
    %v876 = vand.u32 %v864, 2147483648
    %v877 = vor.u32 1.1754944e-38, %v876
    %v878 = vsel %vm875, %v877, %v873
    %v879 = vmul.f32 1.0, %v878
    %v881 = vrot.slane %v879, 2
    %v883 = vmul.f32 %v881, 2.0
    %v884 = vsub.f32 %v883, 1.0
    %v885 = vrot.slane %v879, 1
    %v887 = vmul.f32 %v885, %v762
    %v888 = vmul.f32 %v879, %v884
    %v889 = vadd.f32 %v887, %v888
    %v890 = vtanh.pop %v889
    %v891 = vrot.slane %v879, 3
    %v893 = vmul.f32 %v891, %v890
    %s894 = scalar_lea.vmem [#allocation2], 6
    %v895 = vld [vmem:[%s894] ss:$8 sm:$0xf]
    %896 = vmatpush.msra.mxu0 %v254
    %897 = vmatpush.msra.mxu0 %v250
    %898 = vmatpush.msra.mxu0 %v246
    %899 = vmatpush.msra.mxu0 %v242
    %900 = vmatpush.msra.mxu0 %v238
    %901 = vmatpush.msra.mxu0 %v234
    %902 = vmatpush.msra.mxu0 %v230
    %903 = vmatpush.msra.mxu0 %v226
    %904 = vmatpush.msra.mxu0 %v222
    %905 = vmatpush.msra.mxu0 %v218
    %906 = vmatpush.msra.mxu0 %v214
    %907 = vmatpush.msra.mxu0 %v210
    %908 = vmatpush.msra.mxu0 %v206
    %909 = vmatpush.msra.mxu0 %v202
    %910 = vmatpush.msra.mxu0 %v198
    %911 = vmatpush.msra.mxu0 %v194
    %912 = vmatmul.f32.gmra.mxu0 %v893
    %v913 = vpop.f32.mrf.mxu0
    %v914 = vadd.f32 0.0, %v913
    %915 = vdwg.mxu0
    %916 = vmatpush.msra.mxu0 %v255
    %917 = vmatpush.msra.mxu0 %v251
    %918 = vmatpush.msra.mxu0 %v247
    %919 = vmatpush.msra.mxu0 %v243
    %920 = vmatpush.msra.mxu0 %v239
    %921 = vmatpush.msra.mxu0 %v235
    %922 = vmatpush.msra.mxu0 %v231
    %923 = vmatpush.msra.mxu0 %v227
    %924 = vmatpush.msra.mxu0 %v223
    %925 = vmatpush.msra.mxu0 %v219
    %926 = vmatpush.msra.mxu0 %v215
    %927 = vmatpush.msra.mxu0 %v211
    %928 = vmatpush.msra.mxu0 %v207
    %929 = vmatpush.msra.mxu0 %v203
    %930 = vmatpush.msra.mxu0 %v199
    %931 = vmatpush.msra.mxu0 %v195
    %932 = vmatmul.f32.gmra.mxu0 %v893
    %v933 = vpop.f32.mrf.mxu0
    %v934 = vadd.f32 0.0, %v933
    %935 = vdwg.mxu0
    %936 = vmatpush.msra.mxu0 %v256
    %937 = vmatpush.msra.mxu0 %v252
    %938 = vmatpush.msra.mxu0 %v248
    %939 = vmatpush.msra.mxu0 %v244
    %940 = vmatpush.msra.mxu0 %v240
    %941 = vmatpush.msra.mxu0 %v236
    %942 = vmatpush.msra.mxu0 %v232
    %943 = vmatpush.msra.mxu0 %v228
    %944 = vmatpush.msra.mxu0 %v224
    %945 = vmatpush.msra.mxu0 %v220
    %946 = vmatpush.msra.mxu0 %v216
    %947 = vmatpush.msra.mxu0 %v212
    %948 = vmatpush.msra.mxu0 %v208
    %949 = vmatpush.msra.mxu0 %v204
    %950 = vmatpush.msra.mxu0 %v200
    %951 = vmatpush.msra.mxu0 %v196
    %952 = vmatmul.f32.gmra.mxu0 %v893
    %v953 = vpop.f32.mrf.mxu0
    %v954 = vadd.f32 0.0, %v953
    %955 = vdwg.mxu0
    %956 = vmatpush.msra.mxu0 %v257
    %957 = vmatpush.msra.mxu0 %v253
    %958 = vmatpush.msra.mxu0 %v249
    %959 = vmatpush.msra.mxu0 %v245
    %960 = vmatpush.msra.mxu0 %v241
    %961 = vmatpush.msra.mxu0 %v237
    %962 = vmatpush.msra.mxu0 %v233
    %963 = vmatpush.msra.mxu0 %v229
    %964 = vmatpush.msra.mxu0 %v225
    %965 = vmatpush.msra.mxu0 %v221
    %966 = vmatpush.msra.mxu0 %v217
    %967 = vmatpush.msra.mxu0 %v213
    %968 = vmatpush.msra.mxu0 %v209
    %969 = vmatpush.msra.mxu0 %v205
    %970 = vmatpush.msra.mxu0 %v201
    %971 = vmatpush.msra.mxu0 %v197
    %972 = vmatmul.f32.gmra.mxu0 %v893
    %v973 = vpop.f32.mrf.mxu0
    %v974 = vadd.f32 0.0, %v973
    %975 = vdwg.mxu0
    %v980 = vrot.slane %v934, 7
    %v981 = vrot.slane %v954, 6
    %v982 = vrot.slane %v974, 5
    %v983 = vsel %vm345, %v914, %v980
    %v984 = vsel %vm347, %v981, %v982
    %v985 = vsel %vm349, %v983, %v984
    %v987 = vadd.f32 %v895, %v985
    %v988 = vxor.u32 %v987, 2147483648
    %v989 = vmul.f32 %v988, 1.442695
    %v990 = vpow.pop %v989
    %v991 = vadd.f32 %v990, 1.0
    %v992 = vrcp.pop %v991
    %v993 = vmul.f32 %v991, %v992
    %v994 = vsub.f32 1.0, %v993
    %v995 = vmul.f32 %v992, %v994
    %v996 = vadd.f32 %v992, %v995
    %vm997 = vweird.f32 %v991
    %vm998 = vweird.f32 %v992
    %vm999 = vmor %vm997, %vm998
    %v1000 = vsel %vm999, %v992, %v996
    %v1001 = vand.u32 2147483647, %v991
    %vm1002 = vcmp.eq.f32.partialorder %v1001, 8.507059e+37
    %v1003 = vand.u32 %v991, 2147483648
    %v1004 = vor.u32 1.1754944e-38, %v1003
    %v1005 = vsel %vm1002, %v1004, %v1000
    %v1006 = vmul.f32 1.0, %v1005
    %v1008 = vrot.slane %v1006, 2
    %v1010 = vmul.f32 %v1008, 2.0
    %v1011 = vsub.f32 %v1010, 1.0
    %v1012 = vrot.slane %v1006, 1
    %v1014 = vmul.f32 %v1012, %v889
    %v1015 = vmul.f32 %v1006, %v1011
    %v1016 = vadd.f32 %v1014, %v1015
    %v1017 = vtanh.pop %v1016
    %v1018 = vrot.slane %v1006, 3
    %v1020 = vmul.f32 %v1018, %v1017
    %s1021 = scalar_lea.vmem [#allocation2], 7
    %v1022 = vld [vmem:[%s1021] ss:$8 sm:$0xf]
    %1023 = vmatpush.msra.mxu0 %v254
    %1024 = vmatpush.msra.mxu0 %v250
    %1025 = vmatpush.msra.mxu0 %v246
    %1026 = vmatpush.msra.mxu0 %v242
    %1027 = vmatpush.msra.mxu0 %v238
    %1028 = vmatpush.msra.mxu0 %v234
    %1029 = vmatpush.msra.mxu0 %v230
    %1030 = vmatpush.msra.mxu0 %v226
    %1031 = vmatpush.msra.mxu0 %v222
    %1032 = vmatpush.msra.mxu0 %v218
    %1033 = vmatpush.msra.mxu0 %v214
    %1034 = vmatpush.msra.mxu0 %v210
    %1035 = vmatpush.msra.mxu0 %v206
    %1036 = vmatpush.msra.mxu0 %v202
    %1037 = vmatpush.msra.mxu0 %v198
    %1038 = vmatpush.msra.mxu0 %v194
    %1039 = vmatmul.f32.gmra.mxu0 %v1020
    %v1040 = vpop.f32.mrf.mxu0
    %v1041 = vadd.f32 0.0, %v1040
    %1042 = vdwg.mxu0
    %1043 = vmatpush.msra.mxu0 %v255
    %1044 = vmatpush.msra.mxu0 %v251
    %1045 = vmatpush.msra.mxu0 %v247
    %1046 = vmatpush.msra.mxu0 %v243
    %1047 = vmatpush.msra.mxu0 %v239
    %1048 = vmatpush.msra.mxu0 %v235
    %1049 = vmatpush.msra.mxu0 %v231
    %1050 = vmatpush.msra.mxu0 %v227
    %1051 = vmatpush.msra.mxu0 %v223
    %1052 = vmatpush.msra.mxu0 %v219
    %1053 = vmatpush.msra.mxu0 %v215
    %1054 = vmatpush.msra.mxu0 %v211
    %1055 = vmatpush.msra.mxu0 %v207
    %1056 = vmatpush.msra.mxu0 %v203
    %1057 = vmatpush.msra.mxu0 %v199
    %1058 = vmatpush.msra.mxu0 %v195
    %1059 = vmatmul.f32.gmra.mxu0 %v1020
    %v1060 = vpop.f32.mrf.mxu0
    %v1061 = vadd.f32 0.0, %v1060
    %1062 = vdwg.mxu0
    %1063 = vmatpush.msra.mxu0 %v256
    %1064 = vmatpush.msra.mxu0 %v252
    %1065 = vmatpush.msra.mxu0 %v248
    %1066 = vmatpush.msra.mxu0 %v244
    %1067 = vmatpush.msra.mxu0 %v240
    %1068 = vmatpush.msra.mxu0 %v236
    %1069 = vmatpush.msra.mxu0 %v232
    %1070 = vmatpush.msra.mxu0 %v228
    %1071 = vmatpush.msra.mxu0 %v224
    %1072 = vmatpush.msra.mxu0 %v220
    %1073 = vmatpush.msra.mxu0 %v216
    %1074 = vmatpush.msra.mxu0 %v212
    %1075 = vmatpush.msra.mxu0 %v208
    %1076 = vmatpush.msra.mxu0 %v204
    %1077 = vmatpush.msra.mxu0 %v200
    %1078 = vmatpush.msra.mxu0 %v196
    %1079 = vmatmul.f32.gmra.mxu0 %v1020
    %v1080 = vpop.f32.mrf.mxu0
    %v1081 = vadd.f32 0.0, %v1080
    %1082 = vdwg.mxu0
    %1083 = vmatpush.msra.mxu0 %v257
    %1084 = vmatpush.msra.mxu0 %v253
    %1085 = vmatpush.msra.mxu0 %v249
    %1086 = vmatpush.msra.mxu0 %v245
    %1087 = vmatpush.msra.mxu0 %v241
    %1088 = vmatpush.msra.mxu0 %v237
    %1089 = vmatpush.msra.mxu0 %v233
    %1090 = vmatpush.msra.mxu0 %v229
    %1091 = vmatpush.msra.mxu0 %v225
    %1092 = vmatpush.msra.mxu0 %v221
    %1093 = vmatpush.msra.mxu0 %v217
    %1094 = vmatpush.msra.mxu0 %v213
    %1095 = vmatpush.msra.mxu0 %v209
    %1096 = vmatpush.msra.mxu0 %v205
    %1097 = vmatpush.msra.mxu0 %v201
    %1098 = vmatpush.msra.mxu0 %v197
    %1099 = vmatmul.f32.gmra.mxu0 %v1020
    %v1100 = vpop.f32.mrf.mxu0
    %v1101 = vadd.f32 0.0, %v1100
    %1102 = vdwg.mxu0
    %v1107 = vrot.slane %v1061, 7
    %v1108 = vrot.slane %v1081, 6
    %v1109 = vrot.slane %v1101, 5
    %v1110 = vsel %vm345, %v1041, %v1107
    %v1111 = vsel %vm347, %v1108, %v1109
    %v1112 = vsel %vm349, %v1110, %v1111
    %v1114 = vadd.f32 %v1022, %v1112
    %v1115 = vxor.u32 %v1114, 2147483648
    %v1116 = vmul.f32 %v1115, 1.442695
    %v1117 = vpow.pop %v1116
    %v1118 = vadd.f32 %v1117, 1.0
    %v1119 = vrcp.pop %v1118
    %v1120 = vmul.f32 %v1118, %v1119
    %v1121 = vsub.f32 1.0, %v1120
    %v1122 = vmul.f32 %v1119, %v1121
    %v1123 = vadd.f32 %v1119, %v1122
    %vm1124 = vweird.f32 %v1118
    %vm1125 = vweird.f32 %v1119
    %vm1126 = vmor %vm1124, %vm1125
    %v1127 = vsel %vm1126, %v1119, %v1123
    %v1128 = vand.u32 2147483647, %v1118
    %vm1129 = vcmp.eq.f32.partialorder %v1128, 8.507059e+37
    %v1130 = vand.u32 %v1118, 2147483648
    %v1131 = vor.u32 1.1754944e-38, %v1130
    %v1132 = vsel %vm1129, %v1131, %v1127
    %v1133 = vmul.f32 1.0, %v1132
    %v1135 = vrot.slane %v1133, 2
    %v1137 = vmul.f32 %v1135, 2.0
    %v1138 = vsub.f32 %v1137, 1.0
    %v1139 = vrot.slane %v1133, 1
    %v1141 = vmul.f32 %v1139, %v1016
    %v1142 = vmul.f32 %v1133, %v1138
    %v1143 = vadd.f32 %v1141, %v1142
    %v1144 = vtanh.pop %v1143
    %v1145 = vrot.slane %v1133, 3
    %v1147 = vmul.f32 %v1145, %v1144
    %s1148 = scalar_lea.vmem [#allocation2], 32
    %v1149 = vld [vmem:[%s1148] ss:$8 sm:$0xf]
    %1150 = vmatpush.msra.mxu0 %v254
    %1151 = vmatpush.msra.mxu0 %v250
    %1152 = vmatpush.msra.mxu0 %v246
    %1153 = vmatpush.msra.mxu0 %v242
    %1154 = vmatpush.msra.mxu0 %v238
    %1155 = vmatpush.msra.mxu0 %v234
    %1156 = vmatpush.msra.mxu0 %v230
    %1157 = vmatpush.msra.mxu0 %v226
    %1158 = vmatpush.msra.mxu0 %v222
    %1159 = vmatpush.msra.mxu0 %v218
    %1160 = vmatpush.msra.mxu0 %v214
    %1161 = vmatpush.msra.mxu0 %v210
    %1162 = vmatpush.msra.mxu0 %v206
    %1163 = vmatpush.msra.mxu0 %v202
    %1164 = vmatpush.msra.mxu0 %v198
    %1165 = vmatpush.msra.mxu0 %v194
    %1166 = vmatmul.f32.gmra.mxu0 %v1147
    %v1167 = vpop.f32.mrf.mxu0
    %v1168 = vadd.f32 0.0, %v1167
    %1169 = vdwg.mxu0
    %1170 = vmatpush.msra.mxu0 %v255
    %1171 = vmatpush.msra.mxu0 %v251
    %1172 = vmatpush.msra.mxu0 %v247
    %1173 = vmatpush.msra.mxu0 %v243
    %1174 = vmatpush.msra.mxu0 %v239
    %1175 = vmatpush.msra.mxu0 %v235
    %1176 = vmatpush.msra.mxu0 %v231
    %1177 = vmatpush.msra.mxu0 %v227
    %1178 = vmatpush.msra.mxu0 %v223
    %1179 = vmatpush.msra.mxu0 %v219
    %1180 = vmatpush.msra.mxu0 %v215
    %1181 = vmatpush.msra.mxu0 %v211
    %1182 = vmatpush.msra.mxu0 %v207
    %1183 = vmatpush.msra.mxu0 %v203
    %1184 = vmatpush.msra.mxu0 %v199
    %1185 = vmatpush.msra.mxu0 %v195
    %1186 = vmatmul.f32.gmra.mxu0 %v1147
    %v1187 = vpop.f32.mrf.mxu0
    %v1188 = vadd.f32 0.0, %v1187
    %1189 = vdwg.mxu0
    %1190 = vmatpush.msra.mxu0 %v256
    %1191 = vmatpush.msra.mxu0 %v252
    %1192 = vmatpush.msra.mxu0 %v248
    %1193 = vmatpush.msra.mxu0 %v244
    %1194 = vmatpush.msra.mxu0 %v240
    %1195 = vmatpush.msra.mxu0 %v236
    %1196 = vmatpush.msra.mxu0 %v232
    %1197 = vmatpush.msra.mxu0 %v228
    %1198 = vmatpush.msra.mxu0 %v224
    %1199 = vmatpush.msra.mxu0 %v220
    %1200 = vmatpush.msra.mxu0 %v216
    %1201 = vmatpush.msra.mxu0 %v212
    %1202 = vmatpush.msra.mxu0 %v208
    %1203 = vmatpush.msra.mxu0 %v204
    %1204 = vmatpush.msra.mxu0 %v200
    %1205 = vmatpush.msra.mxu0 %v196
    %1206 = vmatmul.f32.gmra.mxu0 %v1147
    %v1207 = vpop.f32.mrf.mxu0
    %v1208 = vadd.f32 0.0, %v1207
    %1209 = vdwg.mxu0
    %1210 = vmatpush.msra.mxu0 %v257
    %1211 = vmatpush.msra.mxu0 %v253
    %1212 = vmatpush.msra.mxu0 %v249
    %1213 = vmatpush.msra.mxu0 %v245
    %1214 = vmatpush.msra.mxu0 %v241
    %1215 = vmatpush.msra.mxu0 %v237
    %1216 = vmatpush.msra.mxu0 %v233
    %1217 = vmatpush.msra.mxu0 %v229
    %1218 = vmatpush.msra.mxu0 %v225
    %1219 = vmatpush.msra.mxu0 %v221
    %1220 = vmatpush.msra.mxu0 %v217
    %1221 = vmatpush.msra.mxu0 %v213
    %1222 = vmatpush.msra.mxu0 %v209
    %1223 = vmatpush.msra.mxu0 %v205
    %1224 = vmatpush.msra.mxu0 %v201
    %1225 = vmatpush.msra.mxu0 %v197
    %1226 = vmatmul.f32.gmra.mxu0 %v1147
    %v1227 = vpop.f32.mrf.mxu0
    %v1228 = vadd.f32 0.0, %v1227
    %1229 = vdwg.mxu0
    %v1234 = vrot.slane %v1188, 7
    %v1235 = vrot.slane %v1208, 6
    %v1236 = vrot.slane %v1228, 5
    %v1237 = vsel %vm345, %v1168, %v1234
    %v1238 = vsel %vm347, %v1235, %v1236
    %v1239 = vsel %vm349, %v1237, %v1238
    %v1241 = vadd.f32 %v1149, %v1239
    %v1242 = vxor.u32 %v1241, 2147483648
    %v1243 = vmul.f32 %v1242, 1.442695
    %v1244 = vpow.pop %v1243
    %v1245 = vadd.f32 %v1244, 1.0
    %v1246 = vrcp.pop %v1245
    %v1247 = vmul.f32 %v1245, %v1246
    %v1248 = vsub.f32 1.0, %v1247
    %v1249 = vmul.f32 %v1246, %v1248
    %v1250 = vadd.f32 %v1246, %v1249
    %vm1251 = vweird.f32 %v1245
    %vm1252 = vweird.f32 %v1246
    %vm1253 = vmor %vm1251, %vm1252
    %v1254 = vsel %vm1253, %v1246, %v1250
    %v1255 = vand.u32 2147483647, %v1245
    %vm1256 = vcmp.eq.f32.partialorder %v1255, 8.507059e+37
    %v1257 = vand.u32 %v1245, 2147483648
    %v1258 = vor.u32 1.1754944e-38, %v1257
    %v1259 = vsel %vm1256, %v1258, %v1254
    %v1260 = vmul.f32 1.0, %v1259
    %v1262 = vrot.slane %v1260, 2
    %v1264 = vmul.f32 %v1262, 2.0
    %v1265 = vsub.f32 %v1264, 1.0
    %v1266 = vrot.slane %v1260, 1
    %v1268 = vmul.f32 %v1266, %v1143
    %v1269 = vmul.f32 %v1260, %v1265
    %v1270 = vadd.f32 %v1268, %v1269
    %v1271 = vtanh.pop %v1270
    %v1272 = vrot.slane %v1260, 3
    %v1274 = vmul.f32 %v1272, %v1271
    %v1275 = vld [vmem:[%s4] sm:$0x1]
    %v1276 = vmul.f32 %v1274, %v1275
    %v1277 = vsel %vm345, %v1276, 0.0
    %1278 = vadd.xlane.f32.xlu0 %v1277
    %v1279 = vpop.xlane.xlu0 %1278
    %v1280 = vld [vmem:[#allocation3] sm:$0x1]
    %v1281 = vadd.f32 %v1279, %v1280
    %v1282 = vxor.u32 %v1281, 2147483648
    %v1283 = vmul.f32 %v1282, 1.442695
    %v1284 = vpow.pop %v1283
    %v1285 = vadd.f32 %v1284, 1.0
    %v1286 = vrcp.pop %v1285
    %v1287 = vmul.f32 %v1285, %v1286
    %v1288 = vsub.f32 1.0, %v1287
    %v1289 = vmul.f32 %v1286, %v1288
    %v1290 = vadd.f32 %v1286, %v1289
    %vm1291 = vweird.f32 %v1285
    %vm1292 = vweird.f32 %v1286
    %vm1293 = vmor %vm1291, %vm1292
    %v1294 = vsel %vm1293, %v1286, %v1290
    %v1295 = vand.u32 2147483647, %v1285
    %vm1296 = vcmp.eq.f32.partialorder %v1295, 8.507059e+37
    %v1297 = vand.u32 %v1285, 2147483648
    %v1298 = vor.u32 1.1754944e-38, %v1297
    %v1299 = vsel %vm1296, %v1298, %v1294
    %v1300 = vmul.f32 1.0, %v1299
    %vm1301 = vcmask 0
    %1302 = vst.msk [vmem:[#allocation4] sm:$0x1] %vm1301, %v1300
    // Predicated region
    $region26: #{lstm_forward.1} parent=1 // pred_check
      _
    $region27: #{lstm_forward.1} parent=1 // pred_check_branch
      %1304 = sbr.rel (0) target = $region29
    $region28: #{lstm_forward.1} parent=1 // pred_region
      %1306 = vsyncadd [#allocation5], 0
      %s1308 = sshll.u32 [#allocation4], 4
      %s1309 = int_to_ptr.vmem [resolvable:$true] %s1308
      %s1310 = sshll.u32 %s6, 4
      %s1311 = int_to_ptr.hbm [resolvable:$true] %s1310
      %1313 = dma.vmem_to_hbm [thread:$0]  %s1309, 16, %s1311, [#allocation5]
    $region29: #{lstm_forward.1} parent=1 // pred_fallthru
      _
    // Predicated region
    $region30: #{lstm_forward.1} parent=1 // pred_check
      _
    $region31: #{lstm_forward.1} parent=1 // pred_check_branch
      %1315 = sbr.rel (0) target = $region33
    $region32: #{lstm_forward.1} parent=1 // pred_region
      %1317 = dma.done [#allocation5], 16
    $region33: #{lstm_forward.1} parent=1 // pred_fallthru
      _
    %1318 = vsyncpa [#allocation5], 1

</llo_original>
